<compile_context>
chip_gen: v7x
topology: tpu7x:2x2x1
jax: 0.10.0
libtpu: 0.0.40
codegen_flags: <defaults>
</compile_context>

<pallas_src>
import jax
import jax.numpy as jnp
from jax.experimental import pallas as pl
from jax.experimental.pallas import tpu as pltpu


# ----------------------------- Pallas kernels -------------------------------
def _conv_matmul_kernel(w_ref, p_ref, b_ref, o_ref):
    # out(Cout, TM) = relu(W(Cout, K) @ patches(K, TM) + b(Cout, 1))
    y = jnp.dot(w_ref[...], p_ref[...], preferred_element_type=jnp.float32)
    y = jnp.maximum(y + b_ref[...], 0.0)
    o_ref[...] = y.astype(o_ref.dtype)


def _fc_head_kernel(x_ref, w1_ref, b1_ref, w2_ref, b2_ref, o_ref):
    # out(TB, A) = relu(x(TB, K) @ W1(K, 512) + b1) @ W2(512, A) + b2
    h = jnp.dot(x_ref[...], w1_ref[...], preferred_element_type=jnp.float32)
    h = jnp.maximum(h + b1_ref[...], 0.0)
    y = jnp.dot(h.astype(w2_ref.dtype), w2_ref[...],
                preferred_element_type=jnp.float32)
    o_ref[...] = (y + b2_ref[...]).astype(o_ref.dtype)


# --------------------------- spec / tiling helpers ---------------------------
def _round_up(n, m):
    return ((n + m - 1) // m) * m


def _resident_spec(shape):
    """BlockSpec for a grid-invariant (weight/bias) operand.

    Single-buffered when the installed Pallas supports pipeline_mode; the
    block never changes across the grid so double-buffering only wastes VMEM.
    """
    index_map = lambda i, _n=len(shape): (0,) * _n
    try:
        return pl.BlockSpec(shape, index_map, pipeline_mode=pl.Buffered(1))
    except (AttributeError, TypeError):
        return pl.BlockSpec(shape, index_map)


def _pick_tile_m(m, preferred=2048):
    """Large lane tiles (amortize per-step overhead) but keep >=2 grid steps
    whenever possible so the 'parallel' axis can shard across both v7x TCs."""
    if m <= 256:
        return m  # single tile; caller guarantees lane-density (m padded to >=128)
    half = _round_up(pl.cdiv(m, 2), 128)
    return min(preferred, half)


# ------------------------------ Pallas wrappers ------------------------------
def conv_matmul(w_mat, patches, b, *, tile_m=2048, out_dtype=jnp.bfloat16):
    """relu(W @ patches + b), lane-tiled over the big M axis and pipelined."""
    cout, k = w_mat.shape
    k2, m = patches.shape
    assert k == k2
    tm = _pick_tile_m(m, tile_m)
    return pl.pallas_call(
        _conv_matmul_kernel,
        out_shape=jax.ShapeDtypeStruct((cout, m), out_dtype),
        grid=(pl.cdiv(m, tm),),
        in_specs=[
            _resident_spec((cout, k)),                 # weights: VMEM-resident, 1-buf
            pl.BlockSpec((k, tm), lambda i: (0, i)),   # patches: lane-tiled, pipelined
            _resident_spec((cout, 1)),                 # bias: resident, 1-buf
        ],
        out_specs=pl.BlockSpec((cout, tm), lambda i: (0, i)),
        compiler_params=pltpu.CompilerParams(
            dimension_semantics=("parallel",)),
    )(w_mat, patches, b)


def fc_head(x_flat, w1, b1, w2, b2, *, tile_b=256):
    """Fused relu(x @ W1 + b1) @ W2 + b2 in one Pallas call (row-tiled over batch)."""
    bsz, k1 = x_flat.shape
    n1 = w1.shape[1]
    a = w2.shape[1]
    tb = bsz if bsz <= tile_b else tile_b
    return pl.pallas_call(
        _fc_head_kernel,
        out_shape=jax.ShapeDtypeStruct((bsz, a), jnp.float32),
        grid=(pl.cdiv(bsz, tb),),
        in_specs=[
            pl.BlockSpec((tb, k1), lambda i: (i, 0)),
            _resident_spec((k1, n1)),
            _resident_spec((1, n1)),
            _resident_spec((n1, a)),
            _resident_spec((1, a)),
        ],
        out_specs=pl.BlockSpec((tb, a), lambda i: (i, 0)),
        compiler_params=pltpu.CompilerParams(
            dimension_semantics=("parallel",)),
    )(x_flat, w1, b1, w2, b2)


# ------------------------------- JAX glue -----------------------------------
def _im2col_cfirst(act, k, s):
    """act: (C, B, H, W) -> patches (C*k*k, B*Ho*Wo), rows ordered (c, ki, kj).

    Uses k*k static strided slices + stack (no XLA gathers)."""
    c, b, h, w = act.shape
    ho = (h - k) // s + 1
    wo = (w - k) // s + 1
    parts = []
    for ki in range(k):
        for kj in range(k):
            sl = jax.lax.slice(
                act,
                (0, 0, ki, kj),
                (c, b, ki + (ho - 1) * s + 1, kj + (wo - 1) * s + 1),
                (1, 1, s, s))                      # (C, B, Ho, Wo)
            parts.append(sl)
    p = jnp.stack(parts, axis=1)                   # (C, k*k, B, Ho, Wo)
    return p.reshape(c * k * k, b * ho * wo), ho, wo


def conv2d_relu(act, w_mat, b, *, k, stride):
    """Channel-first conv: act (Cin,B,H,W), w_mat (Cout,Cin*k*k) -> (Cout,B,Ho,Wo)."""
    _, bsz, _, _ = act.shape
    cout = w_mat.shape[0]
    patches, ho, wo = _im2col_cfirst(act, k, stride)   # (Cin*k*k, M) bf16
    m = patches.shape[1]
    # Tiny-batch path: pad M up to 128 so conv output stores stay lane-dense.
    m_pad = max(_round_up(m, 128), 128) if m < 128 else m
    if m_pad != m:
        patches = jnp.pad(patches, ((0, 0), (0, m_pad - m)))
    y = conv_matmul(w_mat, patches, b)                 # (Cout, m_pad) bf16
    if m_pad != m:
        y = y[:, :m]
    return y.reshape(cout, bsz, ho, wo)


# --------------------------- parameter construction --------------------------
def _uniform(key, shape, fan_in):
    bound = 1.0 / jnp.sqrt(jnp.float32(fan_in))
    return jax.random.uniform(key, shape, jnp.float32, -bound, bound)


def init_dqn_params(key, input_shape, n_actions):
    """Raw PyTorch-layout parameters (same init scheme as nn.Conv2d / nn.Linear)."""
    if len(input_shape) == 3:
        h, w, c = input_shape
        in_channels = c
    elif len(input_shape) == 4:
        n_frames, h, w, c = input_shape
        in_channels = n_frames * c
    else:
        raise ValueError(f"Invalid input_shape: {input_shape}")

    def out_sz(n, k, s):
        return (n - k) // s + 1

    h1, w1 = out_sz(h, 8, 4), out_sz(w, 8, 4)
    h2, w2 = out_sz(h1, 4, 2), out_sz(w1, 4, 2)
    h3, w3 = out_sz(h2, 3, 1), out_sz(w2, 3, 1)
    conv_output_size = 64 * h3 * w3

    ks = jax.random.split(key, 10)
    params = {
        "conv1_w": _uniform(ks[0], (32, in_channels, 8, 8), in_channels * 8 * 8),
        "conv1_b": _uniform(ks[1], (32,), in_channels * 8 * 8),
        "conv2_w": _uniform(ks[2], (64, 32, 4, 4), 32 * 4 * 4),
        "conv2_b": _uniform(ks[3], (64,), 32 * 4 * 4),
        "conv3_w": _uniform(ks[4], (64, 64, 3, 3), 64 * 3 * 3),
        "conv3_b": _uniform(ks[5], (64,), 64 * 3 * 3),
        "fc1_w": _uniform(ks[6], (512, conv_output_size), conv_output_size),
        "fc1_b": _uniform(ks[7], (512,), conv_output_size),
        "fc2_w": _uniform(ks[8], (n_actions, 512), 512),
        "fc2_b": _uniform(ks[9], (n_actions,), 512),
    }
    return params, in_channels, (h, w)


def prepare_dqn_params(raw):
    """One-time prep: reshape/transpose to kernel layout, cast to bf16,
    fold 1/255 into conv1 weights.  (bf16 params + activations are a real,
    documented precision loss vs the f32 reference.)"""
    p = {}
    p["conv1_w"] = (raw["conv1_w"].reshape(32, -1) * (1.0 / 255.0)).astype(jnp.bfloat16)
    p["conv1_b"] = raw["conv1_b"].reshape(-1, 1).astype(jnp.float32)
    p["conv2_w"] = raw["conv2_w"].reshape(64, -1).astype(jnp.bfloat16)
    p["conv2_b"] = raw["conv2_b"].reshape(-1, 1).astype(jnp.float32)
    p["conv3_w"] = raw["conv3_w"].reshape(64, -1).astype(jnp.bfloat16)
    p["conv3_b"] = raw["conv3_b"].reshape(-1, 1).astype(jnp.float32)
    p["fc1_w"] = raw["fc1_w"].T.astype(jnp.bfloat16)          # (K1, 512)
    p["fc1_b"] = raw["fc1_b"].reshape(1, -1).astype(jnp.float32)
    p["fc2_w"] = raw["fc2_w"].T.astype(jnp.bfloat16)          # (512, A)
    p["fc2_b"] = raw["fc2_b"].reshape(1, -1).astype(jnp.float32)
    return p


# ------------------------------ DQN forward ---------------------------------
def dqn_forward(params, x):
    """x: (B, C, H, W) float32 in [0, 255]. Returns (B, n_actions) float32."""
    bsz = x.shape[0]
    # Cast BEFORE the transpose (halve transposed bytes); channel-first bf16.
    act = jnp.transpose(x.astype(jnp.bfloat16), (1, 0, 2, 3))
    act = conv2d_relu(act, params["conv1_w"], params["conv1_b"], k=8, stride=4)
    act = conv2d_relu(act, params["conv2_w"], params["conv2_b"], k=4, stride=2)
    act = conv2d_relu(act, params["conv3_w"], params["conv3_b"], k=3, stride=1)
    # torch .view(B, -1) on NCHW -> per-sample flatten order (C, H, W).
    x_flat = jnp.transpose(act, (1, 0, 2, 3)).reshape(bsz, -1)
    return fc_head(x_flat, params["fc1_w"], params["fc1_b"],
                   params["fc2_w"], params["fc2_b"])


# --------------------------- pure-JAX reference ------------------------------
def dqn_reference(raw, x):
    def conv(x, w, b, s):
        y = jax.lax.conv_general_dilated(
            x, w, (s, s), "VALID", dimension_numbers=("NCHW", "OIHW", "NCHW"))
        return jax.nn.relu(y + b.reshape(1, -1, 1, 1))
    x = x / 255.0
    x = conv(x, raw["conv1_w"], raw["conv1_b"], 4)
    x = conv(x, raw["conv2_w"], raw["conv2_b"], 2)
    x = conv(x, raw["conv3_w"], raw["conv3_b"], 1)
    x = x.reshape(x.shape[0], -1)
    x = jax.nn.relu(x @ raw["fc1_w"].T + raw["fc1_b"])
    return x @ raw["fc2_w"].T + raw["fc2_b"]


if __name__ == "__main__":
    # Smallest valid spatial size for the 8/4 -> 4/2 -> 3/1 conv chain is 28;
    # use 36x36x4 -> conv_output_size = 64.
    input_shape = (36, 36, 4)   # (h, w, c), PyTorch-style env observation shape
    n_actions = 6
    batch = 2

    key = jax.random.PRNGKey(0)
    pkey, xkey = jax.random.split(key)
    raw_params, in_channels, (h, w) = init_dqn_params(pkey, input_shape, n_actions)
    params = prepare_dqn_params(raw_params)

    # Integer "pixel" inputs in [0, 255] (exactly representable in bf16).
    x = jax.random.randint(xkey, (batch, in_channels, h, w), 0, 256).astype(jnp.float32)

    q = jax.jit(dqn_forward)(params, x)
    jax.block_until_ready(q)
    assert q.shape == (batch, n_actions), q.shape

    # Loose sanity check vs the f32 XLA reference (kernel path is bf16).
    q_ref = jax.jit(dqn_reference)(raw_params, x)
    jax.block_until_ready(q_ref)
    err = float(jnp.max(jnp.abs(q - q_ref)))
    assert err < 1e-1, (err, q, q_ref)

    print("KERNEL_OK")
</pallas_src>

<mosaic_0001>
module attributes {stable_mosaic.version = 11 : i64} {
  func.func @_conv_matmul_kernel(%arg0: i32, %arg1: memref<32x256xbf16, #tpu.memory_space<vmem>>, %arg2: memref<256x128xbf16, #tpu.memory_space<vmem>>, %arg3: memref<32x1xf32, #tpu.memory_space<vmem>>, %arg4: memref<32x128xbf16, #tpu.memory_space<vmem>>) attributes {dimension_semantics = [#tpu.dimension_semantics<parallel>], iteration_bounds = array<i64: 1>, scalar_prefetch = 0 : i64, scratch_operands = 0 : i64, tpu.core_type = #tpu.core_type<tc>, window_params = [{pipeline_mode = #tpu.pipeline_mode<synchronous>, transform_indices = @transform_0, window_bounds = array<i64: 32, 256>}, {transform_indices = @transform_1, window_bounds = array<i64: 256, 128>}, {pipeline_mode = #tpu.pipeline_mode<synchronous>, transform_indices = @transform_2, window_bounds = array<i64: 32, 1>}, {transform_indices = @transform_3, window_bounds = array<i64: 32, 128>}]} {
    %c0 = arith.constant 0 : index
    %c0_0 = arith.constant 0 : index
    %0 = vector.load %arg1[%c0, %c0_0] : memref<32x256xbf16, #tpu.memory_space<vmem>>, vector<32x256xbf16>
    %c0_1 = arith.constant 0 : index
    %c0_2 = arith.constant 0 : index
    %1 = vector.load %arg2[%c0_1, %c0_2] : memref<256x128xbf16, #tpu.memory_space<vmem>>, vector<256x128xbf16>
    %cst = arith.constant dense<0.000000e+00> : vector<32x128xf32>
    %2 = tpu.matmul %0, %1, %cst {dimension_numbers = #tpu.dot_dimension_numbers<[1], [0], [0], [1], [0, 0, 1, 1], [], []>} : vector<32x256xbf16>, vector<256x128xbf16>, vector<32x128xf32> -> vector<32x128xf32>
    %c0_3 = arith.constant 0 : index
    %c0_4 = arith.constant 0 : index
    %3 = vector.load %arg3[%c0_3, %c0_4] : memref<32x1xf32, #tpu.memory_space<vmem>>, vector<32x1xf32>
    %4 = vector.broadcast %3 : vector<32x1xf32> to vector<32x128xf32>
    %5 = arith.addf %2, %4 : vector<32x128xf32>
    %cst_5 = arith.constant 0.000000e+00 : f32
    %6 = vector.broadcast %cst_5 : f32 to vector<32x128xf32>
    %7 = arith.maximumf %5, %6 : vector<32x128xf32>
    %8 = arith.truncf %7 : vector<32x128xf32> to vector<32x128xbf16>
    %c0_6 = arith.constant 0 : index
    %c0_7 = arith.constant 0 : index
    %9 = vector.load %arg4[%c0_6, %c0_7] : memref<32x128xbf16, #tpu.memory_space<vmem>>, vector<32x128xbf16>
    tpu.vector_store %arg4[%c0_6, %c0_7], %8 {strides = array<i32>} : memref<32x128xbf16, #tpu.memory_space<vmem>>, vector<32x128xbf16>,
    return
  }
  func.func @transform_0(%arg0: i32) -> (i32, i32) {
    %c0_i32 = arith.constant 0 : i32
    %c0_i32_0 = arith.constant 0 : i32
    %c0_i32_1 = arith.constant 0 : i32
    return %c0_i32, %c0_i32_0 : i32, i32
  }
  func.func @transform_1(%arg0: i32) -> (i32, i32) {
    %c0_i32 = arith.constant 0 : i32
    %c0_i32_0 = arith.constant 0 : i32
    return %c0_i32, %arg0 : i32, i32
  }
  func.func @transform_2(%arg0: i32) -> (i32, i32) {
    %c0_i32 = arith.constant 0 : i32
    %c0_i32_0 = arith.constant 0 : i32
    %c0_i32_1 = arith.constant 0 : i32
    return %c0_i32, %c0_i32_0 : i32, i32
  }
  func.func @transform_3(%arg0: i32) -> (i32, i32) {
    %c0_i32 = arith.constant 0 : i32
    %c0_i32_0 = arith.constant 0 : i32
    return %c0_i32, %arg0 : i32, i32
  }
}

module attributes {stable_mosaic.version = 11 : i64} {
  func.func @_conv_matmul_kernel(%arg0: i32, %arg1: memref<64x512xbf16, #tpu.memory_space<vmem>>, %arg2: memref<512x128xbf16, #tpu.memory_space<vmem>>, %arg3: memref<64x1xf32, #tpu.memory_space<vmem>>, %arg4: memref<64x128xbf16, #tpu.memory_space<vmem>>) attributes {dimension_semantics = [#tpu.dimension_semantics<parallel>], iteration_bounds = array<i64: 1>, scalar_prefetch = 0 : i64, scratch_operands = 0 : i64, tpu.core_type = #tpu.core_type<tc>, window_params = [{pipeline_mode = #tpu.pipeline_mode<synchronous>, transform_indices = @transform_0, window_bounds = array<i64: 64, 512>}, {transform_indices = @transform_1, window_bounds = array<i64: 512, 128>}, {pipeline_mode = #tpu.pipeline_mode<synchronous>, transform_indices = @transform_2, window_bounds = array<i64: 64, 1>}, {transform_indices = @transform_3, window_bounds = array<i64: 64, 128>}]} {
    %c0 = arith.constant 0 : index
    %c0_0 = arith.constant 0 : index
    %0 = vector.load %arg1[%c0, %c0_0] : memref<64x512xbf16, #tpu.memory_space<vmem>>, vector<64x512xbf16>
    %c0_1 = arith.constant 0 : index
    %c0_2 = arith.constant 0 : index
    %1 = vector.load %arg2[%c0_1, %c0_2] : memref<512x128xbf16, #tpu.memory_space<vmem>>, vector<512x128xbf16>
    %cst = arith.constant dense<0.000000e+00> : vector<64x128xf32>
    %2 = tpu.matmul %0, %1, %cst {dimension_numbers = #tpu.dot_dimension_numbers<[1], [0], [0], [1], [0, 0, 1, 1], [], []>} : vector<64x512xbf16>, vector<512x128xbf16>, vector<64x128xf32> -> vector<64x128xf32>
    %c0_3 = arith.constant 0 : index
    %c0_4 = arith.constant 0 : index
    %3 = vector.load %arg3[%c0_3, %c0_4] : memref<64x1xf32, #tpu.memory_space<vmem>>, vector<64x1xf32>
    %4 = vector.broadcast %3 : vector<64x1xf32> to vector<64x128xf32>
    %5 = arith.addf %2, %4 : vector<64x128xf32>
    %cst_5 = arith.constant 0.000000e+00 : f32
    %6 = vector.broadcast %cst_5 : f32 to vector<64x128xf32>
    %7 = arith.maximumf %5, %6 : vector<64x128xf32>
    %8 = arith.truncf %7 : vector<64x128xf32> to vector<64x128xbf16>
    %c0_6 = arith.constant 0 : index
    %c0_7 = arith.constant 0 : index
    %9 = vector.load %arg4[%c0_6, %c0_7] : memref<64x128xbf16, #tpu.memory_space<vmem>>, vector<64x128xbf16>
    tpu.vector_store %arg4[%c0_6, %c0_7], %8 {strides = array<i32>} : memref<64x128xbf16, #tpu.memory_space<vmem>>, vector<64x128xbf16>,
    return
  }
  func.func @transform_0(%arg0: i32) -> (i32, i32) {
    %c0_i32 = arith.constant 0 : i32
    %c0_i32_0 = arith.constant 0 : i32
    %c0_i32_1 = arith.constant 0 : i32
    return %c0_i32, %c0_i32_0 : i32, i32
  }
  func.func @transform_1(%arg0: i32) -> (i32, i32) {
    %c0_i32 = arith.constant 0 : i32
    %c0_i32_0 = arith.constant 0 : i32
    return %c0_i32, %arg0 : i32, i32
  }
  func.func @transform_2(%arg0: i32) -> (i32, i32) {
    %c0_i32 = arith.constant 0 : i32
    %c0_i32_0 = arith.constant 0 : i32
    %c0_i32_1 = arith.constant 0 : i32
    return %c0_i32, %c0_i32_0 : i32, i32
  }
  func.func @transform_3(%arg0: i32) -> (i32, i32) {
    %c0_i32 = arith.constant 0 : i32
    %c0_i32_0 = arith.constant 0 : i32
    return %c0_i32, %arg0 : i32, i32
  }
}

module attributes {stable_mosaic.version = 11 : i64} {
  func.func @_conv_matmul_kernel(%arg0: i32, %arg1: memref<64x576xbf16, #tpu.memory_space<vmem>>, %arg2: memref<576x128xbf16, #tpu.memory_space<vmem>>, %arg3: memref<64x1xf32, #tpu.memory_space<vmem>>, %arg4: memref<64x128xbf16, #tpu.memory_space<vmem>>) attributes {dimension_semantics = [#tpu.dimension_semantics<parallel>], iteration_bounds = array<i64: 1>, scalar_prefetch = 0 : i64, scratch_operands = 0 : i64, tpu.core_type = #tpu.core_type<tc>, window_params = [{pipeline_mode = #tpu.pipeline_mode<synchronous>, transform_indices = @transform_0, window_bounds = array<i64: 64, 576>}, {transform_indices = @transform_1, window_bounds = array<i64: 576, 128>}, {pipeline_mode = #tpu.pipeline_mode<synchronous>, transform_indices = @transform_2, window_bounds = array<i64: 64, 1>}, {transform_indices = @transform_3, window_bounds = array<i64: 64, 128>}]} {
    %c0 = arith.constant 0 : index
    %c0_0 = arith.constant 0 : index
    %0 = vector.load %arg1[%c0, %c0_0] : memref<64x576xbf16, #tpu.memory_space<vmem>>, vector<64x576xbf16>
    %c0_1 = arith.constant 0 : index
    %c0_2 = arith.constant 0 : index
    %1 = vector.load %arg2[%c0_1, %c0_2] : memref<576x128xbf16, #tpu.memory_space<vmem>>, vector<576x128xbf16>
    %cst = arith.constant dense<0.000000e+00> : vector<64x128xf32>
    %2 = tpu.matmul %0, %1, %cst {dimension_numbers = #tpu.dot_dimension_numbers<[1], [0], [0], [1], [0, 0, 1, 1], [], []>} : vector<64x576xbf16>, vector<576x128xbf16>, vector<64x128xf32> -> vector<64x128xf32>
    %c0_3 = arith.constant 0 : index
    %c0_4 = arith.constant 0 : index
    %3 = vector.load %arg3[%c0_3, %c0_4] : memref<64x1xf32, #tpu.memory_space<vmem>>, vector<64x1xf32>
    %4 = vector.broadcast %3 : vector<64x1xf32> to vector<64x128xf32>
    %5 = arith.addf %2, %4 : vector<64x128xf32>
    %cst_5 = arith.constant 0.000000e+00 : f32
    %6 = vector.broadcast %cst_5 : f32 to vector<64x128xf32>
    %7 = arith.maximumf %5, %6 : vector<64x128xf32>
    %8 = arith.truncf %7 : vector<64x128xf32> to vector<64x128xbf16>
    %c0_6 = arith.constant 0 : index
    %c0_7 = arith.constant 0 : index
    %9 = vector.load %arg4[%c0_6, %c0_7] : memref<64x128xbf16, #tpu.memory_space<vmem>>, vector<64x128xbf16>
    tpu.vector_store %arg4[%c0_6, %c0_7], %8 {strides = array<i32>} : memref<64x128xbf16, #tpu.memory_space<vmem>>, vector<64x128xbf16>,
    return
  }
  func.func @transform_0(%arg0: i32) -> (i32, i32) {
    %c0_i32 = arith.constant 0 : i32
    %c0_i32_0 = arith.constant 0 : i32
    %c0_i32_1 = arith.constant 0 : i32
    return %c0_i32, %c0_i32_0 : i32, i32
  }
  func.func @transform_1(%arg0: i32) -> (i32, i32) {
    %c0_i32 = arith.constant 0 : i32
    %c0_i32_0 = arith.constant 0 : i32
    return %c0_i32, %arg0 : i32, i32
  }
  func.func @transform_2(%arg0: i32) -> (i32, i32) {
    %c0_i32 = arith.constant 0 : i32
    %c0_i32_0 = arith.constant 0 : i32
    %c0_i32_1 = arith.constant 0 : i32
    return %c0_i32, %c0_i32_0 : i32, i32
  }
  func.func @transform_3(%arg0: i32) -> (i32, i32) {
    %c0_i32 = arith.constant 0 : i32
    %c0_i32_0 = arith.constant 0 : i32
    return %c0_i32, %arg0 : i32, i32
  }
}

module attributes {stable_mosaic.version = 11 : i64} {
  func.func @_fc_head_kernel(%arg0: i32, %arg1: memref<2x64xbf16, #tpu.memory_space<vmem>>, %arg2: memref<64x512xbf16, #tpu.memory_space<vmem>>, %arg3: memref<1x512xf32, #tpu.memory_space<vmem>>, %arg4: memref<512x6xbf16, #tpu.memory_space<vmem>>, %arg5: memref<1x6xf32, #tpu.memory_space<vmem>>, %arg6: memref<2x6xf32, #tpu.memory_space<vmem>>) attributes {dimension_semantics = [#tpu.dimension_semantics<parallel>], iteration_bounds = array<i64: 1>, scalar_prefetch = 0 : i64, scratch_operands = 0 : i64, tpu.core_type = #tpu.core_type<tc>, window_params = [{transform_indices = @transform_0, window_bounds = array<i64: 2, 64>}, {pipeline_mode = #tpu.pipeline_mode<synchronous>, transform_indices = @transform_1, window_bounds = array<i64: 64, 512>}, {pipeline_mode = #tpu.pipeline_mode<synchronous>, transform_indices = @transform_2, window_bounds = array<i64: 1, 512>}, {pipeline_mode = #tpu.pipeline_mode<synchronous>, transform_indices = @transform_3, window_bounds = array<i64: 512, 6>}, {pipeline_mode = #tpu.pipeline_mode<synchronous>, transform_indices = @transform_4, window_bounds = array<i64: 1, 6>}, {transform_indices = @transform_5, window_bounds = array<i64: 2, 6>}]} {
    %c0 = arith.constant 0 : index
    %c0_0 = arith.constant 0 : index
    %0 = vector.load %arg1[%c0, %c0_0] : memref<2x64xbf16, #tpu.memory_space<vmem>>, vector<2x64xbf16>
    %c0_1 = arith.constant 0 : index
    %c0_2 = arith.constant 0 : index
    %1 = vector.load %arg2[%c0_1, %c0_2] : memref<64x512xbf16, #tpu.memory_space<vmem>>, vector<64x512xbf16>
    %cst = arith.constant dense<0.000000e+00> : vector<2x512xf32>
    %2 = tpu.matmul %0, %1, %cst {dimension_numbers = #tpu.dot_dimension_numbers<[1], [0], [0], [1], [0, 0, 1, 1], [], []>} : vector<2x64xbf16>, vector<64x512xbf16>, vector<2x512xf32> -> vector<2x512xf32>
    %c0_3 = arith.constant 0 : index
    %c0_4 = arith.constant 0 : index
    %3 = vector.load %arg3[%c0_3, %c0_4] : memref<1x512xf32, #tpu.memory_space<vmem>>, vector<1x512xf32>
    %4 = vector.broadcast %3 : vector<1x512xf32> to vector<2x512xf32>
    %5 = arith.addf %2, %4 : vector<2x512xf32>
    %cst_5 = arith.constant 0.000000e+00 : f32
    %6 = vector.broadcast %cst_5 : f32 to vector<2x512xf32>
    %7 = arith.maximumf %5, %6 : vector<2x512xf32>
    %8 = arith.truncf %7 : vector<2x512xf32> to vector<2x512xbf16>
    %c0_6 = arith.constant 0 : index
    %c0_7 = arith.constant 0 : index
    %9 = vector.load %arg4[%c0_6, %c0_7] : memref<512x6xbf16, #tpu.memory_space<vmem>>, vector<512x6xbf16>
    %cst_8 = arith.constant dense<0.000000e+00> : vector<2x6xf32>
    %10 = tpu.matmul %8, %9, %cst_8 {dimension_numbers = #tpu.dot_dimension_numbers<[1], [0], [0], [1], [0, 0, 1, 1], [], []>} : vector<2x512xbf16>, vector<512x6xbf16>, vector<2x6xf32> -> vector<2x6xf32>
    %c0_9 = arith.constant 0 : index
    %c0_10 = arith.constant 0 : index
    %11 = vector.load %arg5[%c0_9, %c0_10] : memref<1x6xf32, #tpu.memory_space<vmem>>, vector<1x6xf32>
    %12 = vector.broadcast %11 : vector<1x6xf32> to vector<2x6xf32>
    %13 = arith.addf %10, %12 : vector<2x6xf32>
    %c0_11 = arith.constant 0 : index
    %c0_12 = arith.constant 0 : index
    %14 = vector.load %arg6[%c0_11, %c0_12] : memref<2x6xf32, #tpu.memory_space<vmem>>, vector<2x6xf32>
    tpu.vector_store %arg6[%c0_11, %c0_12], %13 {strides = array<i32>} : memref<2x6xf32, #tpu.memory_space<vmem>>, vector<2x6xf32>,
    return
  }
  func.func @transform_0(%arg0: i32) -> (i32, i32) {
    %c0_i32 = arith.constant 0 : i32
    %c0_i32_0 = arith.constant 0 : i32
    return %arg0, %c0_i32 : i32, i32
  }
  func.func @transform_1(%arg0: i32) -> (i32, i32) {
    %c0_i32 = arith.constant 0 : i32
    %c0_i32_0 = arith.constant 0 : i32
    %c0_i32_1 = arith.constant 0 : i32
    return %c0_i32, %c0_i32_0 : i32, i32
  }
  func.func @transform_2(%arg0: i32) -> (i32, i32) {
    %c0_i32 = arith.constant 0 : i32
    %c0_i32_0 = arith.constant 0 : i32
    %c0_i32_1 = arith.constant 0 : i32
    return %c0_i32, %c0_i32_0 : i32, i32
  }
  func.func @transform_3(%arg0: i32) -> (i32, i32) {
    %c0_i32 = arith.constant 0 : i32
    %c0_i32_0 = arith.constant 0 : i32
    %c0_i32_1 = arith.constant 0 : i32
    return %c0_i32, %c0_i32_0 : i32, i32
  }
  func.func @transform_4(%arg0: i32) -> (i32, i32) {
    %c0_i32 = arith.constant 0 : i32
    %c0_i32_0 = arith.constant 0 : i32
    %c0_i32_1 = arith.constant 0 : i32
    return %c0_i32, %c0_i32_0 : i32, i32
  }
  func.func @transform_5(%arg0: i32) -> (i32, i32) {
    %c0_i32 = arith.constant 0 : i32
    %c0_i32_0 = arith.constant 0 : i32
    return %arg0, %c0_i32 : i32, i32
  }
}

</mosaic_0001>

<llo_original>
// kernel: dqn_forward.4
$region0: #{dqn_forward.4}
  #allocation0 [shape = 'u32[]', space=smem, size = 0x4, offset = 0x4, fixed_abs, tag = 'smem constant byte address 0x4 - core index']
  #allocation1 [shape = 'u32[144,128]{1,0:T(1,128)}', space=vmem, size = 0x12000, scoped, tag = 'internal scratch']
  %s0 = inlined_call_operand.vmem [shape: bf16[32,256], index: 0, kind: input, shape index: {}]
  %s1 = inlined_call_operand.vmem [shape: bf16[256,128], index: 1, kind: input, shape index: {}]
  %s2 = inlined_call_operand.vmem [shape: f32[32,1], index: 2, kind: input, shape index: {}]
  %s3 = inlined_call_operand.vmem [shape: bf16[32,128], index: 3, kind: output, shape index: {}]
  %s4 = sld [smem:[#allocation0]]
  $region22: #{dqn_forward.4} parent=0
    _
  %s6 = ssub.s32 1, %s4
  %s7 = scalar_select 0, %s6, %s4
  // Predicated region
  $region2: #{dqn_forward.4} parent=0 // pred_check
    _
  $region3: #{dqn_forward.4} parent=0 // pred_check_branch
    %9 = sbr.rel (0) target = $region5
  $region4: #{dqn_forward.4} parent=0 // pred_region
    _
  $region5: #{dqn_forward.4} parent=0 // pred_fallthru
    _
  // Predicated region
  $region6: #{dqn_forward.4} parent=0 // pred_check
    _
  $region7: #{dqn_forward.4} parent=0 // pred_check_branch
    %11 = sbr.rel (0) target = $region9
  $region8: #{dqn_forward.4} parent=0 // pred_region
    _
  $region9: #{dqn_forward.4} parent=0 // pred_fallthru
    _
  // Predicated region
  $region10: #{dqn_forward.4} parent=0 // pred_check
    _
  $region11: #{dqn_forward.4} parent=0 // pred_check_branch
    %13 = sbr.rel (0) target = $region13
  $region12: #{dqn_forward.4} parent=0 // pred_region
    _
  $region13: #{dqn_forward.4} parent=0 // pred_fallthru
    _
  %v15 = vld [vmem:[%s0] sm:$0xff]
  %v16 = vld [vmem:[%s0 + $0x8] sm:$0xff]
  %v17 = vld [vmem:[%s0 + $0x10] sm:$0xff]
  %v18 = vld [vmem:[%s0 + $0x18] sm:$0xff]
  %v19 = vld [vmem:[%s1] sm:$0xf]
  %v20 = vld [vmem:[%s1 + $0x4] sm:$0xf]
  %v21 = vld [vmem:[%s1 + $0x8] sm:$0xf]
  %v22 = vld [vmem:[%s1 + $0xc] sm:$0xf]
  %v23 = vld [vmem:[%s1 + $0x10] sm:$0xf]
  %v24 = vld [vmem:[%s1 + $0x14] sm:$0xf]
  %v25 = vld [vmem:[%s1 + $0x18] sm:$0xf]
  %v26 = vld [vmem:[%s1 + $0x1c] sm:$0xf]
  %v27 = vld [vmem:[%s1 + $0x20] sm:$0xf]
  %v28 = vld [vmem:[%s1 + $0x24] sm:$0xf]
  %v29 = vld [vmem:[%s1 + $0x28] sm:$0xf]
  %v30 = vld [vmem:[%s1 + $0x2c] sm:$0xf]
  %v31 = vld [vmem:[%s1 + $0x30] sm:$0xf]
  %v32 = vld [vmem:[%s1 + $0x34] sm:$0xf]
  %v33 = vld [vmem:[%s1 + $0x38] sm:$0xf]
  %v34 = vld [vmem:[%s1 + $0x3c] sm:$0xf]
  %v35 = vld [vmem:[%s1 + $0x40] sm:$0xf]
  %v36 = vld [vmem:[%s1 + $0x44] sm:$0xf]
  %v37 = vld [vmem:[%s1 + $0x48] sm:$0xf]
  %v38 = vld [vmem:[%s1 + $0x4c] sm:$0xf]
  %v39 = vld [vmem:[%s1 + $0x50] sm:$0xf]
  %v40 = vld [vmem:[%s1 + $0x54] sm:$0xf]
  %v41 = vld [vmem:[%s1 + $0x58] sm:$0xf]
  %v42 = vld [vmem:[%s1 + $0x5c] sm:$0xf]
  %v43 = vld [vmem:[%s1 + $0x60] sm:$0xf]
  %v44 = vld [vmem:[%s1 + $0x64] sm:$0xf]
  %v45 = vld [vmem:[%s1 + $0x68] sm:$0xf]
  %v46 = vld [vmem:[%s1 + $0x6c] sm:$0xf]
  %v47 = vld [vmem:[%s1 + $0x70] sm:$0xf]
  %v48 = vld [vmem:[%s1 + $0x74] sm:$0xf]
  %v49 = vld [vmem:[%s1 + $0x78] sm:$0xf]
  %v50 = vld [vmem:[%s1 + $0x7c] sm:$0xf]
  %v51 = vld [vmem:[%s2] sm:$0xff]
  %v52 = vld [vmem:[%s2 + $0x8] sm:$0xff]
  %v53 = vld [vmem:[%s2 + $0x10] sm:$0xff]
  %v54 = vld [vmem:[%s2 + $0x18] sm:$0xff]
  %56 = vset.pattern.permute.xlu0 0
  %57 = vperm.xlu0 %56, %v51
  %v58 = vpop.permute.xlu0 %57
  %61 = vset.pattern.permute.xlu0 0
  %62 = vperm.xlu0 %61, %v52
  %v63 = vpop.permute.xlu0 %62
  %66 = vset.pattern.permute.xlu0 0
  %67 = vperm.xlu0 %66, %v53
  %v68 = vpop.permute.xlu0 %67
  %71 = vset.pattern.permute.xlu0 0
  %72 = vperm.xlu0 %71, %v54
  %v73 = vpop.permute.xlu0 %72
  %v79 = vunpack.c.l.b16 %v15
  %v80 = vunpack.c.h.b16 %v15
  %v81 = vunpack.c.l.b16 %v16
  %v82 = vunpack.c.h.b16 %v16
  %v83 = vunpack.c.l.b16 %v17
  %v84 = vunpack.c.h.b16 %v17
  %v85 = vunpack.c.l.b16 %v18
  %v86 = vunpack.c.h.b16 %v18
  %v87 = vpack.c.b16 %v81, %v79
  %v88 = vpack.c.b16 %v82, %v80
  %v89 = vpack.c.b16 %v85, %v83
  %v90 = vpack.c.b16 %v86, %v84
  %v127 = vunpack.c.l.b16 %v19
  %v128 = vunpack.c.l.b16 %v20
  %v129 = vunpack.c.l.b16 %v21
  %v130 = vunpack.c.l.b16 %v22
  %v131 = vunpack.c.l.b16 %v23
  %v132 = vunpack.c.l.b16 %v24
  %v133 = vunpack.c.l.b16 %v25
  %v134 = vunpack.c.l.b16 %v26
  %v135 = vunpack.c.l.b16 %v27
  %v136 = vunpack.c.l.b16 %v28
  %v137 = vunpack.c.l.b16 %v29
  %v138 = vunpack.c.l.b16 %v30
  %v139 = vunpack.c.l.b16 %v31
  %v140 = vunpack.c.l.b16 %v32
  %v141 = vunpack.c.l.b16 %v33
  %v142 = vunpack.c.l.b16 %v34
  %v143 = vunpack.c.l.b16 %v35
  %v144 = vunpack.c.l.b16 %v36
  %v145 = vunpack.c.l.b16 %v37
  %v146 = vunpack.c.l.b16 %v38
  %v147 = vunpack.c.l.b16 %v39
  %v148 = vunpack.c.l.b16 %v40
  %v149 = vunpack.c.l.b16 %v41
  %v150 = vunpack.c.l.b16 %v42
  %v151 = vunpack.c.l.b16 %v43
  %v152 = vunpack.c.l.b16 %v44
  %v153 = vunpack.c.l.b16 %v45
  %v154 = vunpack.c.l.b16 %v46
  %v155 = vunpack.c.l.b16 %v47
  %v156 = vunpack.c.l.b16 %v48
  %v157 = vunpack.c.l.b16 %v49
  %v158 = vunpack.c.l.b16 %v50
  %v159 = vpack.c.b16 %v128, %v127
  %v160 = vpack.c.b16 %v130, %v129
  %v161 = vpack.c.b16 %v132, %v131
  %v162 = vpack.c.b16 %v134, %v133
  %v163 = vpack.c.b16 %v136, %v135
  %v164 = vpack.c.b16 %v138, %v137
  %v165 = vpack.c.b16 %v140, %v139
  %v166 = vpack.c.b16 %v142, %v141
  %v167 = vpack.c.b16 %v144, %v143
  %v168 = vpack.c.b16 %v146, %v145
  %v169 = vpack.c.b16 %v148, %v147
  %v170 = vpack.c.b16 %v150, %v149
  %v171 = vpack.c.b16 %v152, %v151
  %v172 = vpack.c.b16 %v154, %v153
  %v173 = vpack.c.b16 %v156, %v155
  %v174 = vpack.c.b16 %v158, %v157
  %191 = vmatprep.subr.bf16.mxu0 0
  %192 = vmatpush1.bf16.msra.mxu0 %v159
  %193 = vmatprep.subr.bf16.mxu0 0
  %194 = vmatpush1.bf16.msra.mxu0 %v160
  %195 = vmatprep.subr.bf16.mxu0 0
  %196 = vmatpush1.bf16.msra.mxu0 %v161
  %197 = vmatprep.subr.bf16.mxu0 0
  %198 = vmatpush1.bf16.msra.mxu0 %v162
  %199 = vmatprep.subr.bf16.mxu0 0
  %200 = vmatpush1.bf16.msra.mxu0 %v163
  %201 = vmatprep.subr.bf16.mxu0 0
  %202 = vmatpush1.bf16.msra.mxu0 %v164
  %203 = vmatprep.subr.bf16.mxu0 0
  %204 = vmatpush1.bf16.msra.mxu0 %v165
  %205 = vmatprep.subr.bf16.mxu0 0
  %206 = vmatpush1.bf16.msra.mxu0 %v166
  %207 = vmatprep.subr.bf16.mxu0 0
  %208 = vmatpush1.bf16.msra.mxu0 %v167
  %209 = vmatprep.subr.bf16.mxu0 0
  %210 = vmatpush1.bf16.msra.mxu0 %v168
  %211 = vmatprep.subr.bf16.mxu0 0
  %212 = vmatpush1.bf16.msra.mxu0 %v169
  %213 = vmatprep.subr.bf16.mxu0 0
  %214 = vmatpush1.bf16.msra.mxu0 %v170
  %215 = vmatprep.subr.bf16.mxu0 0
  %216 = vmatpush1.bf16.msra.mxu0 %v171
  %217 = vmatprep.subr.bf16.mxu0 0
  %218 = vmatpush1.bf16.msra.mxu0 %v172
  %219 = vmatprep.subr.bf16.mxu0 0
  %220 = vmatpush1.bf16.msra.mxu0 %v173
  %221 = vmatprep.subr.bf16.mxu0 0
  %222 = vmatpush1.bf16.msra.mxu0 %v174
  %223 = vmatprep.mubr.bf16.mxu0 %v88
  %224 = vmatmul.mubr.bf16.gmra.mrb[0].mxu0 %v87
  %v225 = vpop.f32.mrb[0].mxu0
  %v226 = vadd.f32 %v58, %v225
  %v227 = vpop.f32.mrb[0].mxu0
  %v228 = vpop.f32.mrb[0].mxu0
  %v229 = vadd.f32 %v63, %v228
  %v230 = vpop.f32.mrb[0].mxu0
  %231 = vmatprep.mubr.bf16.mxu0 %v90
  %232 = vmatmul.mubr.bf16.gmra.mrb[0].mxu0 %v89
  %v233 = vpop.f32.mrb[0].mxu0
  %v234 = vadd.f32 %v68, %v233
  %v235 = vpop.f32.mrb[0].mxu0
  %v236 = vpop.f32.mrb[0].mxu0
  %v237 = vadd.f32 %v73, %v236
  %v238 = vpop.f32.mrb[0].mxu0
  %239 = vdwg.mxu0
  %v240 = vmax.f32 %v226, 0.0
  %v241 = vmax.f32 %v229, 0.0
  %v242 = vmax.f32 %v234, 0.0
  %v243 = vmax.f32 %v237, 0.0
  %v244 = vpack.c.bf16 %v241, %v240
  %v245 = vpack.c.bf16 %v243, %v242
  %v248 = vunpack.c.l.b16 %v244
  %v249 = vunpack.c.h.b16 %v244
  %v250 = vunpack.c.l.b16 %v245
  %v251 = vunpack.c.h.b16 %v245
  %v252 = vpack.c.b16 %v248, %v248
  %v253 = vpack.c.b16 %v249, %v249
  %v254 = vpack.c.b16 %v250, %v250
  %v255 = vpack.c.b16 %v251, %v251
  %260 = vst [vmem:[%s3] sm:$0xf] %v252
  %261 = vst [vmem:[%s3 + $0x4] sm:$0xf] %v253
  %262 = vst [vmem:[%s3 + $0x8] sm:$0xf] %v254
  %263 = vst [vmem:[%s3 + $0xc] sm:$0xf] %v255
  // Predicated region
  $region14: #{dqn_forward.4} parent=0 // pred_check
    _
  $region15: #{dqn_forward.4} parent=0 // pred_check_branch
    %265 = sbr.rel (0) target = $region17
  $region16: #{dqn_forward.4} parent=0 // pred_region
    _
  $region17: #{dqn_forward.4} parent=0 // pred_fallthru
    _
  // Predicated region
  $region18: #{dqn_forward.4} parent=0 // pred_check
    _
  $region19: #{dqn_forward.4} parent=0 // pred_check_branch
    %267 = sbr.rel (0) target = $region21
  $region20: #{dqn_forward.4} parent=0 // pred_region
    _
  $region21: #{dqn_forward.4} parent=0 // pred_fallthru
    _

// kernel: dqn_forward.5
$region0: #{dqn_forward.5}
  #allocation0 [shape = 'u32[]', space=smem, size = 0x4, offset = 0x4, fixed_abs, tag = 'smem constant byte address 0x4 - core index']
  #allocation1 [shape = 'u32[144,128]{1,0:T(1,128)}', space=vmem, size = 0x12000, scoped, tag = 'internal scratch']
  %s0 = inlined_call_operand.vmem [shape: bf16[64,512], index: 0, kind: input, shape index: {}]
  %s1 = inlined_call_operand.vmem [shape: bf16[512,128], index: 1, kind: input, shape index: {}]
  %s2 = inlined_call_operand.vmem [shape: f32[64,1], index: 2, kind: input, shape index: {}]
  %s3 = inlined_call_operand.vmem [shape: bf16[64,128], index: 3, kind: output, shape index: {}]
  %s4 = sld [smem:[#allocation0]]
  $region22: #{dqn_forward.5} parent=0
    _
  %s6 = ssub.s32 1, %s4
  %s7 = scalar_select 0, %s6, %s4
  // Predicated region
  $region2: #{dqn_forward.5} parent=0 // pred_check
    _
  $region3: #{dqn_forward.5} parent=0 // pred_check_branch
    %9 = sbr.rel (0) target = $region5
  $region4: #{dqn_forward.5} parent=0 // pred_region
    _
  $region5: #{dqn_forward.5} parent=0 // pred_fallthru
    _
  // Predicated region
  $region6: #{dqn_forward.5} parent=0 // pred_check
    _
  $region7: #{dqn_forward.5} parent=0 // pred_check_branch
    %11 = sbr.rel (0) target = $region9
  $region8: #{dqn_forward.5} parent=0 // pred_region
    _
  $region9: #{dqn_forward.5} parent=0 // pred_fallthru
    _
  // Predicated region
  $region10: #{dqn_forward.5} parent=0 // pred_check
    _
  $region11: #{dqn_forward.5} parent=0 // pred_check_branch
    %13 = sbr.rel (0) target = $region13
  $region12: #{dqn_forward.5} parent=0 // pred_region
    _
  $region13: #{dqn_forward.5} parent=0 // pred_fallthru
    _
  %v15 = vld [vmem:[%s0] sm:$0xff]
  %v16 = vld [vmem:[%s0 + $0x8] sm:$0xff]
  %v17 = vld [vmem:[%s0 + $0x10] sm:$0xff]
  %v18 = vld [vmem:[%s0 + $0x18] sm:$0xff]
  %v19 = vld [vmem:[%s0 + $0x20] sm:$0xff]
  %v20 = vld [vmem:[%s0 + $0x28] sm:$0xff]
  %v21 = vld [vmem:[%s0 + $0x30] sm:$0xff]
  %v22 = vld [vmem:[%s0 + $0x38] sm:$0xff]
  %v23 = vld [vmem:[%s0 + $0x40] sm:$0xff]
  %v24 = vld [vmem:[%s0 + $0x48] sm:$0xff]
  %v25 = vld [vmem:[%s0 + $0x50] sm:$0xff]
  %v26 = vld [vmem:[%s0 + $0x58] sm:$0xff]
  %v27 = vld [vmem:[%s0 + $0x60] sm:$0xff]
  %v28 = vld [vmem:[%s0 + $0x68] sm:$0xff]
  %v29 = vld [vmem:[%s0 + $0x70] sm:$0xff]
  %v30 = vld [vmem:[%s0 + $0x78] sm:$0xff]
  %v31 = vld [vmem:[%s1] sm:$0xf]
  %v32 = vld [vmem:[%s1 + $0x4] sm:$0xf]
  %v33 = vld [vmem:[%s1 + $0x8] sm:$0xf]
  %v34 = vld [vmem:[%s1 + $0xc] sm:$0xf]
  %v35 = vld [vmem:[%s1 + $0x10] sm:$0xf]
  %v36 = vld [vmem:[%s1 + $0x14] sm:$0xf]
  %v37 = vld [vmem:[%s1 + $0x18] sm:$0xf]
  %v38 = vld [vmem:[%s1 + $0x1c] sm:$0xf]
  %v39 = vld [vmem:[%s1 + $0x20] sm:$0xf]
  %v40 = vld [vmem:[%s1 + $0x24] sm:$0xf]
  %v41 = vld [vmem:[%s1 + $0x28] sm:$0xf]
  %v42 = vld [vmem:[%s1 + $0x2c] sm:$0xf]
  %v43 = vld [vmem:[%s1 + $0x30] sm:$0xf]
  %v44 = vld [vmem:[%s1 + $0x34] sm:$0xf]
  %v45 = vld [vmem:[%s1 + $0x38] sm:$0xf]
  %v46 = vld [vmem:[%s1 + $0x3c] sm:$0xf]
  %v47 = vld [vmem:[%s1 + $0x40] sm:$0xf]
  %v48 = vld [vmem:[%s1 + $0x44] sm:$0xf]
  %v49 = vld [vmem:[%s1 + $0x48] sm:$0xf]
  %v50 = vld [vmem:[%s1 + $0x4c] sm:$0xf]
  %v51 = vld [vmem:[%s1 + $0x50] sm:$0xf]
  %v52 = vld [vmem:[%s1 + $0x54] sm:$0xf]
  %v53 = vld [vmem:[%s1 + $0x58] sm:$0xf]
  %v54 = vld [vmem:[%s1 + $0x5c] sm:$0xf]
  %v55 = vld [vmem:[%s1 + $0x60] sm:$0xf]
  %v56 = vld [vmem:[%s1 + $0x64] sm:$0xf]
  %v57 = vld [vmem:[%s1 + $0x68] sm:$0xf]
  %v58 = vld [vmem:[%s1 + $0x6c] sm:$0xf]
  %v59 = vld [vmem:[%s1 + $0x70] sm:$0xf]
  %v60 = vld [vmem:[%s1 + $0x74] sm:$0xf]
  %v61 = vld [vmem:[%s1 + $0x78] sm:$0xf]
  %v62 = vld [vmem:[%s1 + $0x7c] sm:$0xf]
  %v63 = vld [vmem:[%s1 + $0x80] sm:$0xf]
  %v64 = vld [vmem:[%s1 + $0x84] sm:$0xf]
  %v65 = vld [vmem:[%s1 + $0x88] sm:$0xf]
  %v66 = vld [vmem:[%s1 + $0x8c] sm:$0xf]
  %v67 = vld [vmem:[%s1 + $0x90] sm:$0xf]
  %v68 = vld [vmem:[%s1 + $0x94] sm:$0xf]
  %v69 = vld [vmem:[%s1 + $0x98] sm:$0xf]
  %v70 = vld [vmem:[%s1 + $0x9c] sm:$0xf]
  %v71 = vld [vmem:[%s1 + $0xa0] sm:$0xf]
  %v72 = vld [vmem:[%s1 + $0xa4] sm:$0xf]
  %v73 = vld [vmem:[%s1 + $0xa8] sm:$0xf]
  %v74 = vld [vmem:[%s1 + $0xac] sm:$0xf]
  %v75 = vld [vmem:[%s1 + $0xb0] sm:$0xf]
  %v76 = vld [vmem:[%s1 + $0xb4] sm:$0xf]
  %v77 = vld [vmem:[%s1 + $0xb8] sm:$0xf]
  %v78 = vld [vmem:[%s1 + $0xbc] sm:$0xf]
  %v79 = vld [vmem:[%s1 + $0xc0] sm:$0xf]
  %v80 = vld [vmem:[%s1 + $0xc4] sm:$0xf]
  %v81 = vld [vmem:[%s1 + $0xc8] sm:$0xf]
  %v82 = vld [vmem:[%s1 + $0xcc] sm:$0xf]
  %v83 = vld [vmem:[%s1 + $0xd0] sm:$0xf]
  %v84 = vld [vmem:[%s1 + $0xd4] sm:$0xf]
  %v85 = vld [vmem:[%s1 + $0xd8] sm:$0xf]
  %v86 = vld [vmem:[%s1 + $0xdc] sm:$0xf]
  %v87 = vld [vmem:[%s1 + $0xe0] sm:$0xf]
  %v88 = vld [vmem:[%s1 + $0xe4] sm:$0xf]
  %v89 = vld [vmem:[%s1 + $0xe8] sm:$0xf]
  %v90 = vld [vmem:[%s1 + $0xec] sm:$0xf]
  %v91 = vld [vmem:[%s1 + $0xf0] sm:$0xf]
  %v92 = vld [vmem:[%s1 + $0xf4] sm:$0xf]
  %v93 = vld [vmem:[%s1 + $0xf8] sm:$0xf]
  %v94 = vld [vmem:[%s1 + $0xfc] sm:$0xf]
  %v95 = vld [vmem:[%s2] sm:$0xff]
  %v96 = vld [vmem:[%s2 + $0x8] sm:$0xff]
  %v97 = vld [vmem:[%s2 + $0x10] sm:$0xff]
  %v98 = vld [vmem:[%s2 + $0x18] sm:$0xff]
  %v99 = vld [vmem:[%s2 + $0x20] sm:$0xff]
  %v100 = vld [vmem:[%s2 + $0x28] sm:$0xff]
  %v101 = vld [vmem:[%s2 + $0x30] sm:$0xff]
  %v102 = vld [vmem:[%s2 + $0x38] sm:$0xff]
  %104 = vset.pattern.permute.xlu0 0
  %105 = vperm.xlu0 %104, %v95
  %v106 = vpop.permute.xlu0 %105
  %109 = vset.pattern.permute.xlu0 0
  %110 = vperm.xlu0 %109, %v96
  %v111 = vpop.permute.xlu0 %110
  %114 = vset.pattern.permute.xlu0 0
  %115 = vperm.xlu0 %114, %v97
  %v116 = vpop.permute.xlu0 %115
  %119 = vset.pattern.permute.xlu0 0
  %120 = vperm.xlu0 %119, %v98
  %v121 = vpop.permute.xlu0 %120
  %124 = vset.pattern.permute.xlu0 0
  %125 = vperm.xlu0 %124, %v99
  %v126 = vpop.permute.xlu0 %125
  %129 = vset.pattern.permute.xlu0 0
  %130 = vperm.xlu0 %129, %v100
  %v131 = vpop.permute.xlu0 %130
  %134 = vset.pattern.permute.xlu0 0
  %135 = vperm.xlu0 %134, %v101
  %v136 = vpop.permute.xlu0 %135
  %139 = vset.pattern.permute.xlu0 0
  %140 = vperm.xlu0 %139, %v102
  %v141 = vpop.permute.xlu0 %140
  %v159 = vunpack.c.l.b16 %v15
  %v160 = vunpack.c.h.b16 %v15
  %v161 = vunpack.c.l.b16 %v16
  %v162 = vunpack.c.h.b16 %v16
  %v163 = vunpack.c.l.b16 %v17
  %v164 = vunpack.c.h.b16 %v17
  %v165 = vunpack.c.l.b16 %v18
  %v166 = vunpack.c.h.b16 %v18
  %v167 = vunpack.c.l.b16 %v19
  %v168 = vunpack.c.h.b16 %v19
  %v169 = vunpack.c.l.b16 %v20
  %v170 = vunpack.c.h.b16 %v20
  %v171 = vunpack.c.l.b16 %v21
  %v172 = vunpack.c.h.b16 %v21
  %v173 = vunpack.c.l.b16 %v22
  %v174 = vunpack.c.h.b16 %v22
  %v175 = vunpack.c.l.b16 %v23
  %v176 = vunpack.c.h.b16 %v23
  %v177 = vunpack.c.l.b16 %v24
  %v178 = vunpack.c.h.b16 %v24
  %v179 = vunpack.c.l.b16 %v25
  %v180 = vunpack.c.h.b16 %v25
  %v181 = vunpack.c.l.b16 %v26
  %v182 = vunpack.c.h.b16 %v26
  %v183 = vunpack.c.l.b16 %v27
  %v184 = vunpack.c.h.b16 %v27
  %v185 = vunpack.c.l.b16 %v28
  %v186 = vunpack.c.h.b16 %v28
  %v187 = vunpack.c.l.b16 %v29
  %v188 = vunpack.c.h.b16 %v29
  %v189 = vunpack.c.l.b16 %v30
  %v190 = vunpack.c.h.b16 %v30
  %v191 = vpack.c.b16 %v163, %v159
  %v192 = vpack.c.b16 %v164, %v160
  %v193 = vpack.c.b16 %v165, %v161
  %v194 = vpack.c.b16 %v166, %v162
  %v195 = vpack.c.b16 %v171, %v167
  %v196 = vpack.c.b16 %v172, %v168
  %v197 = vpack.c.b16 %v173, %v169
  %v198 = vpack.c.b16 %v174, %v170
  %v199 = vpack.c.b16 %v179, %v175
  %v200 = vpack.c.b16 %v180, %v176
  %v201 = vpack.c.b16 %v181, %v177
  %v202 = vpack.c.b16 %v182, %v178
  %v203 = vpack.c.b16 %v187, %v183
  %v204 = vpack.c.b16 %v188, %v184
  %v205 = vpack.c.b16 %v189, %v185
  %v206 = vpack.c.b16 %v190, %v186
  %v287 = vunpack.c.l.b16 %v31
  %v288 = vunpack.c.l.b16 %v32
  %v289 = vunpack.c.l.b16 %v33
  %v290 = vunpack.c.l.b16 %v34
  %v291 = vunpack.c.l.b16 %v35
  %v292 = vunpack.c.l.b16 %v36
  %v293 = vunpack.c.l.b16 %v37
  %v294 = vunpack.c.l.b16 %v38
  %v295 = vunpack.c.l.b16 %v39
  %v296 = vunpack.c.l.b16 %v40
  %v297 = vunpack.c.l.b16 %v41
  %v298 = vunpack.c.l.b16 %v42
  %v299 = vunpack.c.l.b16 %v43
  %v300 = vunpack.c.l.b16 %v44
  %v301 = vunpack.c.l.b16 %v45
  %v302 = vunpack.c.l.b16 %v46
  %v303 = vunpack.c.l.b16 %v47
  %v304 = vunpack.c.l.b16 %v48
  %v305 = vunpack.c.l.b16 %v49
  %v306 = vunpack.c.l.b16 %v50
  %v307 = vunpack.c.l.b16 %v51
  %v308 = vunpack.c.l.b16 %v52
  %v309 = vunpack.c.l.b16 %v53
  %v310 = vunpack.c.l.b16 %v54
  %v311 = vunpack.c.l.b16 %v55
  %v312 = vunpack.c.l.b16 %v56
  %v313 = vunpack.c.l.b16 %v57
  %v314 = vunpack.c.l.b16 %v58
  %v315 = vunpack.c.l.b16 %v59
  %v316 = vunpack.c.l.b16 %v60
  %v317 = vunpack.c.l.b16 %v61
  %v318 = vunpack.c.l.b16 %v62
  %v319 = vunpack.c.l.b16 %v63
  %v320 = vunpack.c.l.b16 %v64
  %v321 = vunpack.c.l.b16 %v65
  %v322 = vunpack.c.l.b16 %v66
  %v323 = vunpack.c.l.b16 %v67
  %v324 = vunpack.c.l.b16 %v68
  %v325 = vunpack.c.l.b16 %v69
  %v326 = vunpack.c.l.b16 %v70
  %v327 = vunpack.c.l.b16 %v71
  %v328 = vunpack.c.l.b16 %v72
  %v329 = vunpack.c.l.b16 %v73
  %v330 = vunpack.c.l.b16 %v74
  %v331 = vunpack.c.l.b16 %v75
  %v332 = vunpack.c.l.b16 %v76
  %v333 = vunpack.c.l.b16 %v77
  %v334 = vunpack.c.l.b16 %v78
  %v335 = vunpack.c.l.b16 %v79
  %v336 = vunpack.c.l.b16 %v80
  %v337 = vunpack.c.l.b16 %v81
  %v338 = vunpack.c.l.b16 %v82
  %v339 = vunpack.c.l.b16 %v83
  %v340 = vunpack.c.l.b16 %v84
  %v341 = vunpack.c.l.b16 %v85
  %v342 = vunpack.c.l.b16 %v86
  %v343 = vunpack.c.l.b16 %v87
  %v344 = vunpack.c.l.b16 %v88
  %v345 = vunpack.c.l.b16 %v89
  %v346 = vunpack.c.l.b16 %v90
  %v347 = vunpack.c.l.b16 %v91
  %v348 = vunpack.c.l.b16 %v92
  %v349 = vunpack.c.l.b16 %v93
  %v350 = vunpack.c.l.b16 %v94
  %v351 = vpack.c.b16 %v288, %v287
  %v352 = vpack.c.b16 %v290, %v289
  %v353 = vpack.c.b16 %v292, %v291
  %v354 = vpack.c.b16 %v294, %v293
  %v355 = vpack.c.b16 %v296, %v295
  %v356 = vpack.c.b16 %v298, %v297
  %v357 = vpack.c.b16 %v300, %v299
  %v358 = vpack.c.b16 %v302, %v301
  %v359 = vpack.c.b16 %v304, %v303
  %v360 = vpack.c.b16 %v306, %v305
  %v361 = vpack.c.b16 %v308, %v307
  %v362 = vpack.c.b16 %v310, %v309
  %v363 = vpack.c.b16 %v312, %v311
  %v364 = vpack.c.b16 %v314, %v313
  %v365 = vpack.c.b16 %v316, %v315
  %v366 = vpack.c.b16 %v318, %v317
  %v367 = vpack.c.b16 %v320, %v319
  %v368 = vpack.c.b16 %v322, %v321
  %v369 = vpack.c.b16 %v324, %v323
  %v370 = vpack.c.b16 %v326, %v325
  %v371 = vpack.c.b16 %v328, %v327
  %v372 = vpack.c.b16 %v330, %v329
  %v373 = vpack.c.b16 %v332, %v331
  %v374 = vpack.c.b16 %v334, %v333
  %v375 = vpack.c.b16 %v336, %v335
  %v376 = vpack.c.b16 %v338, %v337
  %v377 = vpack.c.b16 %v340, %v339
  %v378 = vpack.c.b16 %v342, %v341
  %v379 = vpack.c.b16 %v344, %v343
  %v380 = vpack.c.b16 %v346, %v345
  %v381 = vpack.c.b16 %v348, %v347
  %v382 = vpack.c.b16 %v350, %v349
  %415 = vmatprep.subr.bf16.mxu0 0
  %416 = vmatpush1.bf16.msra.mxu0 %v351
  %417 = vmatprep.subr.bf16.mxu0 0
  %418 = vmatpush1.bf16.msra.mxu0 %v352
  %419 = vmatprep.subr.bf16.mxu0 0
  %420 = vmatpush1.bf16.msra.mxu0 %v353
  %421 = vmatprep.subr.bf16.mxu0 0
  %422 = vmatpush1.bf16.msra.mxu0 %v354
  %423 = vmatprep.subr.bf16.mxu0 0
  %424 = vmatpush1.bf16.msra.mxu0 %v355
  %425 = vmatprep.subr.bf16.mxu0 0
  %426 = vmatpush1.bf16.msra.mxu0 %v356
  %427 = vmatprep.subr.bf16.mxu0 0
  %428 = vmatpush1.bf16.msra.mxu0 %v357
  %429 = vmatprep.subr.bf16.mxu0 0
  %430 = vmatpush1.bf16.msra.mxu0 %v358
  %431 = vmatprep.subr.bf16.mxu0 0
  %432 = vmatpush1.bf16.msra.mxu0 %v359
  %433 = vmatprep.subr.bf16.mxu0 0
  %434 = vmatpush1.bf16.msra.mxu0 %v360
  %435 = vmatprep.subr.bf16.mxu0 0
  %436 = vmatpush1.bf16.msra.mxu0 %v361
  %437 = vmatprep.subr.bf16.mxu0 0
  %438 = vmatpush1.bf16.msra.mxu0 %v362
  %439 = vmatprep.subr.bf16.mxu0 0
  %440 = vmatpush1.bf16.msra.mxu0 %v363
  %441 = vmatprep.subr.bf16.mxu0 0
  %442 = vmatpush1.bf16.msra.mxu0 %v364
  %443 = vmatprep.subr.bf16.mxu0 0
  %444 = vmatpush1.bf16.msra.mxu0 %v365
  %445 = vmatprep.subr.bf16.mxu0 0
  %446 = vmatpush1.bf16.msra.mxu0 %v366
  %447 = vmatprep.mubr.bf16.mxu0 %v192
  %448 = vmatmul.mubr.bf16.gmra.mrb[0].mxu0 %v191
  %v449 = vpop.f32.mrb[0].mxu0
  %v450 = vadd.f32 %v106, %v449
  %v451 = vpop.f32.mrb[0].mxu0
  %v452 = vpop.f32.mrb[0].mxu0
  %v453 = vadd.f32 %v111, %v452
  %v454 = vpop.f32.mrb[0].mxu0
  %455 = vmatprep.mubr.bf16.mxu0 %v196
  %456 = vmatmul.mubr.bf16.gmra.mrb[0].mxu0 %v195
  %v457 = vpop.f32.mrb[0].mxu0
  %v458 = vadd.f32 %v116, %v457
  %v459 = vpop.f32.mrb[0].mxu0
  %v460 = vpop.f32.mrb[0].mxu0
  %v461 = vadd.f32 %v121, %v460
  %v462 = vpop.f32.mrb[0].mxu0
  %463 = vmatprep.mubr.bf16.mxu0 %v200
  %464 = vmatmul.mubr.bf16.gmra.mrb[0].mxu0 %v199
  %v465 = vpop.f32.mrb[0].mxu0
  %v466 = vadd.f32 %v126, %v465
  %v467 = vpop.f32.mrb[0].mxu0
  %v468 = vpop.f32.mrb[0].mxu0
  %v469 = vadd.f32 %v131, %v468
  %v470 = vpop.f32.mrb[0].mxu0
  %471 = vmatprep.mubr.bf16.mxu0 %v204
  %472 = vmatmul.mubr.bf16.gmra.mrb[0].mxu0 %v203
  %v473 = vpop.f32.mrb[0].mxu0
  %v474 = vadd.f32 %v136, %v473
  %v475 = vpop.f32.mrb[0].mxu0
  %v476 = vpop.f32.mrb[0].mxu0
  %v477 = vadd.f32 %v141, %v476
  %v478 = vpop.f32.mrb[0].mxu0
  %479 = vdwg.mxu0
  %480 = vmatprep.subr.bf16.mxu0 0
  %481 = vmatpush1.bf16.msra.mxu0 %v367
  %482 = vmatprep.subr.bf16.mxu0 0
  %483 = vmatpush1.bf16.msra.mxu0 %v368
  %484 = vmatprep.subr.bf16.mxu0 0
  %485 = vmatpush1.bf16.msra.mxu0 %v369
  %486 = vmatprep.subr.bf16.mxu0 0
  %487 = vmatpush1.bf16.msra.mxu0 %v370
  %488 = vmatprep.subr.bf16.mxu0 0
  %489 = vmatpush1.bf16.msra.mxu0 %v371
  %490 = vmatprep.subr.bf16.mxu0 0
  %491 = vmatpush1.bf16.msra.mxu0 %v372
  %492 = vmatprep.subr.bf16.mxu0 0
  %493 = vmatpush1.bf16.msra.mxu0 %v373
  %494 = vmatprep.subr.bf16.mxu0 0
  %495 = vmatpush1.bf16.msra.mxu0 %v374
  %496 = vmatprep.subr.bf16.mxu0 0
  %497 = vmatpush1.bf16.msra.mxu0 %v375
  %498 = vmatprep.subr.bf16.mxu0 0
  %499 = vmatpush1.bf16.msra.mxu0 %v376
  %500 = vmatprep.subr.bf16.mxu0 0
  %501 = vmatpush1.bf16.msra.mxu0 %v377
  %502 = vmatprep.subr.bf16.mxu0 0
  %503 = vmatpush1.bf16.msra.mxu0 %v378
  %504 = vmatprep.subr.bf16.mxu0 0
  %505 = vmatpush1.bf16.msra.mxu0 %v379
  %506 = vmatprep.subr.bf16.mxu0 0
  %507 = vmatpush1.bf16.msra.mxu0 %v380
  %508 = vmatprep.subr.bf16.mxu0 0
  %509 = vmatpush1.bf16.msra.mxu0 %v381
  %510 = vmatprep.subr.bf16.mxu0 0
  %511 = vmatpush1.bf16.msra.mxu0 %v382
  %512 = vmatprep.mubr.bf16.mxu0 %v194
  %513 = vmatmul.mubr.bf16.gmra.mrb[0].mxu0 %v193
  %v514 = vpop.f32.mrb[0].mxu0
  %v515 = vadd.f32 %v450, %v514
  %v516 = vpop.f32.mrb[0].mxu0
  %v517 = vpop.f32.mrb[0].mxu0
  %v518 = vadd.f32 %v453, %v517
  %v519 = vpop.f32.mrb[0].mxu0
  %520 = vmatprep.mubr.bf16.mxu0 %v198
  %521 = vmatmul.mubr.bf16.gmra.mrb[0].mxu0 %v197
  %v522 = vpop.f32.mrb[0].mxu0
  %v523 = vadd.f32 %v458, %v522
  %v524 = vpop.f32.mrb[0].mxu0
  %v525 = vpop.f32.mrb[0].mxu0
  %v526 = vadd.f32 %v461, %v525
  %v527 = vpop.f32.mrb[0].mxu0
  %528 = vmatprep.mubr.bf16.mxu0 %v202
  %529 = vmatmul.mubr.bf16.gmra.mrb[0].mxu0 %v201
  %v530 = vpop.f32.mrb[0].mxu0
  %v531 = vadd.f32 %v466, %v530
  %v532 = vpop.f32.mrb[0].mxu0
  %v533 = vpop.f32.mrb[0].mxu0
  %v534 = vadd.f32 %v469, %v533
  %v535 = vpop.f32.mrb[0].mxu0
  %536 = vmatprep.mubr.bf16.mxu0 %v206
  %537 = vmatmul.mubr.bf16.gmra.mrb[0].mxu0 %v205
  %v538 = vpop.f32.mrb[0].mxu0
  %v539 = vadd.f32 %v474, %v538
  %v540 = vpop.f32.mrb[0].mxu0
  %v541 = vpop.f32.mrb[0].mxu0
  %v542 = vadd.f32 %v477, %v541
  %v543 = vpop.f32.mrb[0].mxu0
  %544 = vdwg.mxu0
  %v545 = vmax.f32 %v515, 0.0
  %v546 = vmax.f32 %v518, 0.0
  %v547 = vmax.f32 %v523, 0.0
  %v548 = vmax.f32 %v526, 0.0
  %v549 = vmax.f32 %v531, 0.0
  %v550 = vmax.f32 %v534, 0.0
  %v551 = vmax.f32 %v539, 0.0
  %v552 = vmax.f32 %v542, 0.0
  %v553 = vpack.c.bf16 %v546, %v545
  %v554 = vpack.c.bf16 %v548, %v547
  %v555 = vpack.c.bf16 %v550, %v549
  %v556 = vpack.c.bf16 %v552, %v551
  %v561 = vunpack.c.l.b16 %v553
  %v562 = vunpack.c.h.b16 %v553
  %v563 = vunpack.c.l.b16 %v554
  %v564 = vunpack.c.h.b16 %v554
  %v565 = vunpack.c.l.b16 %v555
  %v566 = vunpack.c.h.b16 %v555
  %v567 = vunpack.c.l.b16 %v556
  %v568 = vunpack.c.h.b16 %v556
  %v569 = vpack.c.b16 %v561, %v561
  %v570 = vpack.c.b16 %v562, %v562
  %v571 = vpack.c.b16 %v563, %v563
  %v572 = vpack.c.b16 %v564, %v564
  %v573 = vpack.c.b16 %v565, %v565
  %v574 = vpack.c.b16 %v566, %v566
  %v575 = vpack.c.b16 %v567, %v567
  %v576 = vpack.c.b16 %v568, %v568
  %585 = vst [vmem:[%s3] sm:$0xf] %v569
  %586 = vst [vmem:[%s3 + $0x4] sm:$0xf] %v570
  %587 = vst [vmem:[%s3 + $0x8] sm:$0xf] %v571
  %588 = vst [vmem:[%s3 + $0xc] sm:$0xf] %v572
  %589 = vst [vmem:[%s3 + $0x10] sm:$0xf] %v573
  %590 = vst [vmem:[%s3 + $0x14] sm:$0xf] %v574
  %591 = vst [vmem:[%s3 + $0x18] sm:$0xf] %v575
  %592 = vst [vmem:[%s3 + $0x1c] sm:$0xf] %v576
  // Predicated region
  $region14: #{dqn_forward.5} parent=0 // pred_check
    _
  $region15: #{dqn_forward.5} parent=0 // pred_check_branch
    %594 = sbr.rel (0) target = $region17
  $region16: #{dqn_forward.5} parent=0 // pred_region
    _
  $region17: #{dqn_forward.5} parent=0 // pred_fallthru
    _
  // Predicated region
  $region18: #{dqn_forward.5} parent=0 // pred_check
    _
  $region19: #{dqn_forward.5} parent=0 // pred_check_branch
    %596 = sbr.rel (0) target = $region21
  $region20: #{dqn_forward.5} parent=0 // pred_region
    _
  $region21: #{dqn_forward.5} parent=0 // pred_fallthru
    _

// kernel: dqn_forward.6
$region0: #{dqn_forward.6}
  #allocation0 [shape = 'u32[]', space=smem, size = 0x4, offset = 0x4, fixed_abs, tag = 'smem constant byte address 0x4 - core index']
  #allocation1 [shape = 'u32[144,128]{1,0:T(1,128)}', space=vmem, size = 0x12000, scoped, tag = 'internal scratch']
  %s0 = inlined_call_operand.vmem [shape: bf16[64,576], index: 0, kind: input, shape index: {}]
  %s1 = inlined_call_operand.vmem [shape: bf16[576,128], index: 1, kind: input, shape index: {}]
  %s2 = inlined_call_operand.vmem [shape: f32[64,1], index: 2, kind: input, shape index: {}]
  %s3 = inlined_call_operand.vmem [shape: bf16[64,128], index: 3, kind: output, shape index: {}]
  %s4 = sld [smem:[#allocation0]]
  $region22: #{dqn_forward.6} parent=0
    _
  %s6 = ssub.s32 1, %s4
  %s7 = scalar_select 0, %s6, %s4
  // Predicated region
  $region2: #{dqn_forward.6} parent=0 // pred_check
    _
  $region3: #{dqn_forward.6} parent=0 // pred_check_branch
    %9 = sbr.rel (0) target = $region5
  $region4: #{dqn_forward.6} parent=0 // pred_region
    _
  $region5: #{dqn_forward.6} parent=0 // pred_fallthru
    _
  // Predicated region
  $region6: #{dqn_forward.6} parent=0 // pred_check
    _
  $region7: #{dqn_forward.6} parent=0 // pred_check_branch
    %11 = sbr.rel (0) target = $region9
  $region8: #{dqn_forward.6} parent=0 // pred_region
    _
  $region9: #{dqn_forward.6} parent=0 // pred_fallthru
    _
  // Predicated region
  $region10: #{dqn_forward.6} parent=0 // pred_check
    _
  $region11: #{dqn_forward.6} parent=0 // pred_check_branch
    %13 = sbr.rel (0) target = $region13
  $region12: #{dqn_forward.6} parent=0 // pred_region
    _
  $region13: #{dqn_forward.6} parent=0 // pred_fallthru
    _
  %v15 = vld [vmem:[%s0] sm:$0xff]
  %v16 = vld [vmem:[%s0 + $0x8] sm:$0xff]
  %v17 = vld [vmem:[%s0 + $0x10] sm:$0xf]
  %v18 = vld [vmem:[%s0 + $0x14] sm:$0xff]
  %v19 = vld [vmem:[%s0 + $0x1c] sm:$0xff]
  %v20 = vld [vmem:[%s0 + $0x24] sm:$0xf]
  %v21 = vld [vmem:[%s0 + $0x28] sm:$0xff]
  %v22 = vld [vmem:[%s0 + $0x30] sm:$0xff]
  %v23 = vld [vmem:[%s0 + $0x38] sm:$0xf]
  %v24 = vld [vmem:[%s0 + $0x3c] sm:$0xff]
  %v25 = vld [vmem:[%s0 + $0x44] sm:$0xff]
  %v26 = vld [vmem:[%s0 + $0x4c] sm:$0xf]
  %v27 = vld [vmem:[%s0 + $0x50] sm:$0xff]
  %v28 = vld [vmem:[%s0 + $0x58] sm:$0xff]
  %v29 = vld [vmem:[%s0 + $0x60] sm:$0xf]
  %v30 = vld [vmem:[%s0 + $0x64] sm:$0xff]
  %v31 = vld [vmem:[%s0 + $0x6c] sm:$0xff]
  %v32 = vld [vmem:[%s0 + $0x74] sm:$0xf]
  %v33 = vld [vmem:[%s0 + $0x78] sm:$0xff]
  %v34 = vld [vmem:[%s0 + $0x80] sm:$0xff]
  %v35 = vld [vmem:[%s0 + $0x88] sm:$0xf]
  %v36 = vld [vmem:[%s0 + $0x8c] sm:$0xff]
  %v37 = vld [vmem:[%s0 + $0x94] sm:$0xff]
  %v38 = vld [vmem:[%s0 + $0x9c] sm:$0xf]
  %v39 = vld [vmem:[%s1] sm:$0xf]
  %v40 = vld [vmem:[%s1 + $0x4] sm:$0xf]
  %v41 = vld [vmem:[%s1 + $0x8] sm:$0xf]
  %v42 = vld [vmem:[%s1 + $0xc] sm:$0xf]
  %v43 = vld [vmem:[%s1 + $0x10] sm:$0xf]
  %v44 = vld [vmem:[%s1 + $0x14] sm:$0xf]
  %v45 = vld [vmem:[%s1 + $0x18] sm:$0xf]
  %v46 = vld [vmem:[%s1 + $0x1c] sm:$0xf]
  %v47 = vld [vmem:[%s1 + $0x20] sm:$0xf]
  %v48 = vld [vmem:[%s1 + $0x24] sm:$0xf]
  %v49 = vld [vmem:[%s1 + $0x28] sm:$0xf]
  %v50 = vld [vmem:[%s1 + $0x2c] sm:$0xf]
  %v51 = vld [vmem:[%s1 + $0x30] sm:$0xf]
  %v52 = vld [vmem:[%s1 + $0x34] sm:$0xf]
  %v53 = vld [vmem:[%s1 + $0x38] sm:$0xf]
  %v54 = vld [vmem:[%s1 + $0x3c] sm:$0xf]
  %v55 = vld [vmem:[%s1 + $0x40] sm:$0xf]
  %v56 = vld [vmem:[%s1 + $0x44] sm:$0xf]
  %v57 = vld [vmem:[%s1 + $0x48] sm:$0xf]
  %v58 = vld [vmem:[%s1 + $0x4c] sm:$0xf]
  %v59 = vld [vmem:[%s1 + $0x50] sm:$0xf]
  %v60 = vld [vmem:[%s1 + $0x54] sm:$0xf]
  %v61 = vld [vmem:[%s1 + $0x58] sm:$0xf]
  %v62 = vld [vmem:[%s1 + $0x5c] sm:$0xf]
  %v63 = vld [vmem:[%s1 + $0x60] sm:$0xf]
  %v64 = vld [vmem:[%s1 + $0x64] sm:$0xf]
  %v65 = vld [vmem:[%s1 + $0x68] sm:$0xf]
  %v66 = vld [vmem:[%s1 + $0x6c] sm:$0xf]
  %v67 = vld [vmem:[%s1 + $0x70] sm:$0xf]
  %v68 = vld [vmem:[%s1 + $0x74] sm:$0xf]
  %v69 = vld [vmem:[%s1 + $0x78] sm:$0xf]
  %v70 = vld [vmem:[%s1 + $0x7c] sm:$0xf]
  %v71 = vld [vmem:[%s1 + $0x80] sm:$0xf]
  %v72 = vld [vmem:[%s1 + $0x84] sm:$0xf]
  %v73 = vld [vmem:[%s1 + $0x88] sm:$0xf]
  %v74 = vld [vmem:[%s1 + $0x8c] sm:$0xf]
  %v75 = vld [vmem:[%s1 + $0x90] sm:$0xf]
  %v76 = vld [vmem:[%s1 + $0x94] sm:$0xf]
  %v77 = vld [vmem:[%s1 + $0x98] sm:$0xf]
  %v78 = vld [vmem:[%s1 + $0x9c] sm:$0xf]
  %v79 = vld [vmem:[%s1 + $0xa0] sm:$0xf]
  %v80 = vld [vmem:[%s1 + $0xa4] sm:$0xf]
  %v81 = vld [vmem:[%s1 + $0xa8] sm:$0xf]
  %v82 = vld [vmem:[%s1 + $0xac] sm:$0xf]
  %v83 = vld [vmem:[%s1 + $0xb0] sm:$0xf]
  %v84 = vld [vmem:[%s1 + $0xb4] sm:$0xf]
  %v85 = vld [vmem:[%s1 + $0xb8] sm:$0xf]
  %v86 = vld [vmem:[%s1 + $0xbc] sm:$0xf]
  %v87 = vld [vmem:[%s1 + $0xc0] sm:$0xf]
  %v88 = vld [vmem:[%s1 + $0xc4] sm:$0xf]
  %v89 = vld [vmem:[%s1 + $0xc8] sm:$0xf]
  %v90 = vld [vmem:[%s1 + $0xcc] sm:$0xf]
  %v91 = vld [vmem:[%s1 + $0xd0] sm:$0xf]
  %v92 = vld [vmem:[%s1 + $0xd4] sm:$0xf]
  %v93 = vld [vmem:[%s1 + $0xd8] sm:$0xf]
  %v94 = vld [vmem:[%s1 + $0xdc] sm:$0xf]
  %v95 = vld [vmem:[%s1 + $0xe0] sm:$0xf]
  %v96 = vld [vmem:[%s1 + $0xe4] sm:$0xf]
  %v97 = vld [vmem:[%s1 + $0xe8] sm:$0xf]
  %v98 = vld [vmem:[%s1 + $0xec] sm:$0xf]
  %v99 = vld [vmem:[%s1 + $0xf0] sm:$0xf]
  %v100 = vld [vmem:[%s1 + $0xf4] sm:$0xf]
  %v101 = vld [vmem:[%s1 + $0xf8] sm:$0xf]
  %v102 = vld [vmem:[%s1 + $0xfc] sm:$0xf]
  %v103 = vld [vmem:[%s1 + $0x100] sm:$0xf]
  %v104 = vld [vmem:[%s1 + $0x104] sm:$0xf]
  %v105 = vld [vmem:[%s1 + $0x108] sm:$0xf]
  %v106 = vld [vmem:[%s1 + $0x10c] sm:$0xf]
  %v107 = vld [vmem:[%s1 + $0x110] sm:$0xf]
  %v108 = vld [vmem:[%s1 + $0x114] sm:$0xf]
  %v109 = vld [vmem:[%s1 + $0x118] sm:$0xf]
  %v110 = vld [vmem:[%s1 + $0x11c] sm:$0xf]
  %v111 = vld [vmem:[%s2] sm:$0xff]
  %v112 = vld [vmem:[%s2 + $0x8] sm:$0xff]
  %v113 = vld [vmem:[%s2 + $0x10] sm:$0xff]
  %v114 = vld [vmem:[%s2 + $0x18] sm:$0xff]
  %v115 = vld [vmem:[%s2 + $0x20] sm:$0xff]
  %v116 = vld [vmem:[%s2 + $0x28] sm:$0xff]
  %v117 = vld [vmem:[%s2 + $0x30] sm:$0xff]
  %v118 = vld [vmem:[%s2 + $0x38] sm:$0xff]
  %120 = vset.pattern.permute.xlu0 0
  %121 = vperm.xlu0 %120, %v111
  %v122 = vpop.permute.xlu0 %121
  %125 = vset.pattern.permute.xlu0 0
  %126 = vperm.xlu0 %125, %v112
  %v127 = vpop.permute.xlu0 %126
  %130 = vset.pattern.permute.xlu0 0
  %131 = vperm.xlu0 %130, %v113
  %v132 = vpop.permute.xlu0 %131
  %135 = vset.pattern.permute.xlu0 0
  %136 = vperm.xlu0 %135, %v114
  %v137 = vpop.permute.xlu0 %136
  %140 = vset.pattern.permute.xlu0 0
  %141 = vperm.xlu0 %140, %v115
  %v142 = vpop.permute.xlu0 %141
  %145 = vset.pattern.permute.xlu0 0
  %146 = vperm.xlu0 %145, %v116
  %v147 = vpop.permute.xlu0 %146
  %150 = vset.pattern.permute.xlu0 0
  %151 = vperm.xlu0 %150, %v117
  %v152 = vpop.permute.xlu0 %151
  %155 = vset.pattern.permute.xlu0 0
  %156 = vperm.xlu0 %155, %v118
  %v157 = vpop.permute.xlu0 %156
  %v183 = vunpack.c.l.b16 %v15
  %v184 = vunpack.c.h.b16 %v15
  %v185 = vunpack.c.l.b16 %v16
  %v186 = vunpack.c.h.b16 %v16
  %v187 = vunpack.c.l.b16 %v17
  %v188 = vunpack.c.l.b16 %v18
  %v189 = vunpack.c.h.b16 %v18
  %v190 = vunpack.c.l.b16 %v19
  %v191 = vunpack.c.h.b16 %v19
  %v192 = vunpack.c.l.b16 %v20
  %v193 = vunpack.c.l.b16 %v21
  %v194 = vunpack.c.h.b16 %v21
  %v195 = vunpack.c.l.b16 %v22
  %v196 = vunpack.c.h.b16 %v22
  %v197 = vunpack.c.l.b16 %v23
  %v198 = vunpack.c.l.b16 %v24
  %v199 = vunpack.c.h.b16 %v24
  %v200 = vunpack.c.l.b16 %v25
  %v201 = vunpack.c.h.b16 %v25
  %v202 = vunpack.c.l.b16 %v26
  %v203 = vunpack.c.l.b16 %v27
  %v204 = vunpack.c.h.b16 %v27
  %v205 = vunpack.c.l.b16 %v28
  %v206 = vunpack.c.h.b16 %v28
  %v207 = vunpack.c.l.b16 %v29
  %v208 = vunpack.c.l.b16 %v30
  %v209 = vunpack.c.h.b16 %v30
  %v210 = vunpack.c.l.b16 %v31
  %v211 = vunpack.c.h.b16 %v31
  %v212 = vunpack.c.l.b16 %v32
  %v213 = vunpack.c.l.b16 %v33
  %v214 = vunpack.c.h.b16 %v33
  %v215 = vunpack.c.l.b16 %v34
  %v216 = vunpack.c.h.b16 %v34
  %v217 = vunpack.c.l.b16 %v35
  %v218 = vunpack.c.l.b16 %v36
  %v219 = vunpack.c.h.b16 %v36
  %v220 = vunpack.c.l.b16 %v37
  %v221 = vunpack.c.h.b16 %v37
  %v222 = vunpack.c.l.b16 %v38
  %v223 = vpack.c.b16 %v188, %v183
  %v224 = vpack.c.b16 %v189, %v184
  %v225 = vpack.c.b16 %v190, %v185
  %v226 = vpack.c.b16 %v191, %v186
  %v227 = vpack.c.b16 %v192, %v187
  %v228 = vpack.c.b16 %v198, %v193
  %v229 = vpack.c.b16 %v199, %v194
  %v230 = vpack.c.b16 %v200, %v195
  %v231 = vpack.c.b16 %v201, %v196
  %v232 = vpack.c.b16 %v202, %v197
  %v233 = vpack.c.b16 %v208, %v203
  %v234 = vpack.c.b16 %v209, %v204
  %v235 = vpack.c.b16 %v210, %v205
  %v236 = vpack.c.b16 %v211, %v206
  %v237 = vpack.c.b16 %v212, %v207
  %v238 = vpack.c.b16 %v218, %v213
  %v239 = vpack.c.b16 %v219, %v214
  %v240 = vpack.c.b16 %v220, %v215
  %v241 = vpack.c.b16 %v221, %v216
  %v242 = vpack.c.b16 %v222, %v217
  %v331 = vunpack.c.l.b16 %v39
  %v332 = vunpack.c.l.b16 %v40
  %v333 = vunpack.c.l.b16 %v41
  %v334 = vunpack.c.l.b16 %v42
  %v335 = vunpack.c.l.b16 %v43
  %v336 = vunpack.c.l.b16 %v44
  %v337 = vunpack.c.l.b16 %v45
  %v338 = vunpack.c.l.b16 %v46
  %v339 = vunpack.c.l.b16 %v47
  %v340 = vunpack.c.l.b16 %v48
  %v341 = vunpack.c.l.b16 %v49
  %v342 = vunpack.c.l.b16 %v50
  %v343 = vunpack.c.l.b16 %v51
  %v344 = vunpack.c.l.b16 %v52
  %v345 = vunpack.c.l.b16 %v53
  %v346 = vunpack.c.l.b16 %v54
  %v347 = vunpack.c.l.b16 %v55
  %v348 = vunpack.c.l.b16 %v56
  %v349 = vunpack.c.l.b16 %v57
  %v350 = vunpack.c.l.b16 %v58
  %v351 = vunpack.c.l.b16 %v59
  %v352 = vunpack.c.l.b16 %v60
  %v353 = vunpack.c.l.b16 %v61
  %v354 = vunpack.c.l.b16 %v62
  %v355 = vunpack.c.l.b16 %v63
  %v356 = vunpack.c.l.b16 %v64
  %v357 = vunpack.c.l.b16 %v65
  %v358 = vunpack.c.l.b16 %v66
  %v359 = vunpack.c.l.b16 %v67
  %v360 = vunpack.c.l.b16 %v68
  %v361 = vunpack.c.l.b16 %v69
  %v362 = vunpack.c.l.b16 %v70
  %v363 = vunpack.c.l.b16 %v71
  %v364 = vunpack.c.l.b16 %v72
  %v365 = vunpack.c.l.b16 %v73
  %v366 = vunpack.c.l.b16 %v74
  %v367 = vunpack.c.l.b16 %v75
  %v368 = vunpack.c.l.b16 %v76
  %v369 = vunpack.c.l.b16 %v77
  %v370 = vunpack.c.l.b16 %v78
  %v371 = vunpack.c.l.b16 %v79
  %v372 = vunpack.c.l.b16 %v80
  %v373 = vunpack.c.l.b16 %v81
  %v374 = vunpack.c.l.b16 %v82
  %v375 = vunpack.c.l.b16 %v83
  %v376 = vunpack.c.l.b16 %v84
  %v377 = vunpack.c.l.b16 %v85
  %v378 = vunpack.c.l.b16 %v86
  %v379 = vunpack.c.l.b16 %v87
  %v380 = vunpack.c.l.b16 %v88
  %v381 = vunpack.c.l.b16 %v89
  %v382 = vunpack.c.l.b16 %v90
  %v383 = vunpack.c.l.b16 %v91
  %v384 = vunpack.c.l.b16 %v92
  %v385 = vunpack.c.l.b16 %v93
  %v386 = vunpack.c.l.b16 %v94
  %v387 = vunpack.c.l.b16 %v95
  %v388 = vunpack.c.l.b16 %v96
  %v389 = vunpack.c.l.b16 %v97
  %v390 = vunpack.c.l.b16 %v98
  %v391 = vunpack.c.l.b16 %v99
  %v392 = vunpack.c.l.b16 %v100
  %v393 = vunpack.c.l.b16 %v101
  %v394 = vunpack.c.l.b16 %v102
  %v395 = vunpack.c.l.b16 %v103
  %v396 = vunpack.c.l.b16 %v104
  %v397 = vunpack.c.l.b16 %v105
  %v398 = vunpack.c.l.b16 %v106
  %v399 = vunpack.c.l.b16 %v107
  %v400 = vunpack.c.l.b16 %v108
  %v401 = vunpack.c.l.b16 %v109
  %v402 = vunpack.c.l.b16 %v110
  %v403 = vpack.c.b16 %v332, %v331
  %v404 = vpack.c.b16 %v334, %v333
  %v405 = vpack.c.b16 %v336, %v335
  %v406 = vpack.c.b16 %v338, %v337
  %v407 = vpack.c.b16 %v340, %v339
  %v408 = vpack.c.b16 %v342, %v341
  %v409 = vpack.c.b16 %v344, %v343
  %v410 = vpack.c.b16 %v346, %v345
  %v411 = vpack.c.b16 %v348, %v347
  %v412 = vpack.c.b16 %v350, %v349
  %v413 = vpack.c.b16 %v352, %v351
  %v414 = vpack.c.b16 %v354, %v353
  %v415 = vpack.c.b16 %v356, %v355
  %v416 = vpack.c.b16 %v358, %v357
  %v417 = vpack.c.b16 %v360, %v359
  %v418 = vpack.c.b16 %v362, %v361
  %v419 = vpack.c.b16 %v364, %v363
  %v420 = vpack.c.b16 %v366, %v365
  %v421 = vpack.c.b16 %v368, %v367
  %v422 = vpack.c.b16 %v370, %v369
  %v423 = vpack.c.b16 %v372, %v371
  %v424 = vpack.c.b16 %v374, %v373
  %v425 = vpack.c.b16 %v376, %v375
  %v426 = vpack.c.b16 %v378, %v377
  %v427 = vpack.c.b16 %v380, %v379
  %v428 = vpack.c.b16 %v382, %v381
  %v429 = vpack.c.b16 %v384, %v383
  %v430 = vpack.c.b16 %v386, %v385
  %v431 = vpack.c.b16 %v388, %v387
  %v432 = vpack.c.b16 %v390, %v389
  %v433 = vpack.c.b16 %v392, %v391
  %v434 = vpack.c.b16 %v394, %v393
  %v435 = vpack.c.b16 %v396, %v395
  %v436 = vpack.c.b16 %v398, %v397
  %v437 = vpack.c.b16 %v400, %v399
  %v438 = vpack.c.b16 %v402, %v401
  %vm475 = vcmask 523264
  %v477 = vsel %vm475, %v227, 0
  %v480 = vsel %vm475, %v232, 0
  %v483 = vsel %vm475, %v237, 0
  %v486 = vsel %vm475, %v242, 0
  %488 = vmatprep.subr.bf16.mxu0 0
  %489 = vmatpush1.bf16.msra.mxu0 %v403
  %490 = vmatprep.subr.bf16.mxu0 0
  %491 = vmatpush1.bf16.msra.mxu0 %v404
  %492 = vmatprep.subr.bf16.mxu0 0
  %493 = vmatpush1.bf16.msra.mxu0 %v405
  %494 = vmatprep.subr.bf16.mxu0 0
  %495 = vmatpush1.bf16.msra.mxu0 %v406
  %496 = vmatprep.subr.bf16.mxu0 0
  %497 = vmatpush1.bf16.msra.mxu0 %v407
  %498 = vmatprep.subr.bf16.mxu0 0
  %499 = vmatpush1.bf16.msra.mxu0 %v408
  %500 = vmatprep.subr.bf16.mxu0 0
  %501 = vmatpush1.bf16.msra.mxu0 %v409
  %502 = vmatprep.subr.bf16.mxu0 0
  %503 = vmatpush1.bf16.msra.mxu0 %v410
  %504 = vmatprep.subr.bf16.mxu0 0
  %505 = vmatpush1.bf16.msra.mxu0 %v411
  %506 = vmatprep.subr.bf16.mxu0 0
  %507 = vmatpush1.bf16.msra.mxu0 %v412
  %508 = vmatprep.subr.bf16.mxu0 0
  %509 = vmatpush1.bf16.msra.mxu0 %v413
  %510 = vmatprep.subr.bf16.mxu0 0
  %511 = vmatpush1.bf16.msra.mxu0 %v414
  %512 = vmatprep.subr.bf16.mxu0 0
  %513 = vmatpush1.bf16.msra.mxu0 %v415
  %514 = vmatprep.subr.bf16.mxu0 0
  %515 = vmatpush1.bf16.msra.mxu0 %v416
  %516 = vmatprep.subr.bf16.mxu0 0
  %517 = vmatpush1.bf16.msra.mxu0 %v417
  %518 = vmatprep.subr.bf16.mxu0 0
  %519 = vmatpush1.bf16.msra.mxu0 %v418
  %520 = vmatprep.mubr.bf16.mxu0 %v224
  %521 = vmatmul.mubr.bf16.gmra.mrb[0].mxu0 %v223
  %v522 = vpop.f32.mrb[0].mxu0
  %v523 = vadd.f32 %v122, %v522
  %v524 = vpop.f32.mrb[0].mxu0
  %v525 = vpop.f32.mrb[0].mxu0
  %v526 = vadd.f32 %v127, %v525
  %v527 = vpop.f32.mrb[0].mxu0
  %528 = vmatprep.mubr.bf16.mxu0 %v229
  %529 = vmatmul.mubr.bf16.gmra.mrb[0].mxu0 %v228
  %v530 = vpop.f32.mrb[0].mxu0
  %v531 = vadd.f32 %v132, %v530
  %v532 = vpop.f32.mrb[0].mxu0
  %v533 = vpop.f32.mrb[0].mxu0
  %v534 = vadd.f32 %v137, %v533
  %v535 = vpop.f32.mrb[0].mxu0
  %536 = vmatprep.mubr.bf16.mxu0 %v234
  %537 = vmatmul.mubr.bf16.gmra.mrb[0].mxu0 %v233
  %v538 = vpop.f32.mrb[0].mxu0
  %v539 = vadd.f32 %v142, %v538
  %v540 = vpop.f32.mrb[0].mxu0
  %v541 = vpop.f32.mrb[0].mxu0
  %v542 = vadd.f32 %v147, %v541
  %v543 = vpop.f32.mrb[0].mxu0
  %544 = vmatprep.mubr.bf16.mxu0 %v239
  %545 = vmatmul.mubr.bf16.gmra.mrb[0].mxu0 %v238
  %v546 = vpop.f32.mrb[0].mxu0
  %v547 = vadd.f32 %v152, %v546
  %v548 = vpop.f32.mrb[0].mxu0
  %v549 = vpop.f32.mrb[0].mxu0
  %v550 = vadd.f32 %v157, %v549
  %v551 = vpop.f32.mrb[0].mxu0
  %552 = vdwg.mxu0
  %553 = vmatprep.subr.bf16.mxu0 0
  %554 = vmatpush1.bf16.msra.mxu0 %v419
  %555 = vmatprep.subr.bf16.mxu0 0
  %556 = vmatpush1.bf16.msra.mxu0 %v420
  %557 = vmatprep.subr.bf16.mxu0 0
  %558 = vmatpush1.bf16.msra.mxu0 %v421
  %559 = vmatprep.subr.bf16.mxu0 0
  %560 = vmatpush1.bf16.msra.mxu0 %v422
  %561 = vmatprep.subr.bf16.mxu0 0
  %562 = vmatpush1.bf16.msra.mxu0 %v423
  %563 = vmatprep.subr.bf16.mxu0 0
  %564 = vmatpush1.bf16.msra.mxu0 %v424
  %565 = vmatprep.subr.bf16.mxu0 0
  %566 = vmatpush1.bf16.msra.mxu0 %v425
  %567 = vmatprep.subr.bf16.mxu0 0
  %568 = vmatpush1.bf16.msra.mxu0 %v426
  %569 = vmatprep.subr.bf16.mxu0 0
  %570 = vmatpush1.bf16.msra.mxu0 %v427
  %571 = vmatprep.subr.bf16.mxu0 0
  %572 = vmatpush1.bf16.msra.mxu0 %v428
  %573 = vmatprep.subr.bf16.mxu0 0
  %574 = vmatpush1.bf16.msra.mxu0 %v429
  %575 = vmatprep.subr.bf16.mxu0 0
  %576 = vmatpush1.bf16.msra.mxu0 %v430
  %577 = vmatprep.subr.bf16.mxu0 0
  %578 = vmatpush1.bf16.msra.mxu0 %v431
  %579 = vmatprep.subr.bf16.mxu0 0
  %580 = vmatpush1.bf16.msra.mxu0 %v432
  %581 = vmatprep.subr.bf16.mxu0 0
  %582 = vmatpush1.bf16.msra.mxu0 %v433
  %583 = vmatprep.subr.bf16.mxu0 0
  %584 = vmatpush1.bf16.msra.mxu0 %v434
  %585 = vmatprep.mubr.bf16.mxu0 %v226
  %586 = vmatmul.mubr.bf16.gmra.mrb[0].mxu0 %v225
  %v587 = vpop.f32.mrb[0].mxu0
  %v588 = vadd.f32 %v523, %v587
  %v589 = vpop.f32.mrb[0].mxu0
  %v590 = vpop.f32.mrb[0].mxu0
  %v591 = vadd.f32 %v526, %v590
  %v592 = vpop.f32.mrb[0].mxu0
  %593 = vmatprep.mubr.bf16.mxu0 %v231
  %594 = vmatmul.mubr.bf16.gmra.mrb[0].mxu0 %v230
  %v595 = vpop.f32.mrb[0].mxu0
  %v596 = vadd.f32 %v531, %v595
  %v597 = vpop.f32.mrb[0].mxu0
  %v598 = vpop.f32.mrb[0].mxu0
  %v599 = vadd.f32 %v534, %v598
  %v600 = vpop.f32.mrb[0].mxu0
  %601 = vmatprep.mubr.bf16.mxu0 %v236
  %602 = vmatmul.mubr.bf16.gmra.mrb[0].mxu0 %v235
  %v603 = vpop.f32.mrb[0].mxu0
  %v604 = vadd.f32 %v539, %v603
  %v605 = vpop.f32.mrb[0].mxu0
  %v606 = vpop.f32.mrb[0].mxu0
  %v607 = vadd.f32 %v542, %v606
  %v608 = vpop.f32.mrb[0].mxu0
  %609 = vmatprep.mubr.bf16.mxu0 %v241
  %610 = vmatmul.mubr.bf16.gmra.mrb[0].mxu0 %v240
  %v611 = vpop.f32.mrb[0].mxu0
  %v612 = vadd.f32 %v547, %v611
  %v613 = vpop.f32.mrb[0].mxu0
  %v614 = vpop.f32.mrb[0].mxu0
  %v615 = vadd.f32 %v550, %v614
  %v616 = vpop.f32.mrb[0].mxu0
  %617 = vdwg.mxu0
  %618 = vmatprep.subr.bf16.mxu0 0
  %619 = vmatpush1.bf16.msra.mxu0 %v435
  %620 = vmatprep.subr.bf16.mxu0 0
  %621 = vmatpush1.bf16.msra.mxu0 %v436
  %622 = vmatprep.subr.bf16.mxu0 0
  %623 = vmatpush1.bf16.msra.mxu0 %v437
  %624 = vmatprep.subr.bf16.mxu0 0
  %625 = vmatpush1.bf16.msra.mxu0 %v438
  %626 = vmatprep.subr.bf16.mxu0 0
  %627 = vmatpush1.bf16.msra.mxu0 0
  %628 = vmatprep.subr.bf16.mxu0 0
  %629 = vmatpush1.bf16.msra.mxu0 0
  %630 = vmatprep.subr.bf16.mxu0 0
  %631 = vmatpush1.bf16.msra.mxu0 0
  %632 = vmatprep.subr.bf16.mxu0 0
  %633 = vmatpush1.bf16.msra.mxu0 0
  %634 = vmatprep.subr.bf16.mxu0 0
  %635 = vmatpush1.bf16.msra.mxu0 0
  %636 = vmatprep.subr.bf16.mxu0 0
  %637 = vmatpush1.bf16.msra.mxu0 0
  %638 = vmatprep.subr.bf16.mxu0 0
  %639 = vmatpush1.bf16.msra.mxu0 0
  %640 = vmatprep.subr.bf16.mxu0 0
  %641 = vmatpush1.bf16.msra.mxu0 0
  %642 = vmatprep.subr.bf16.mxu0 0
  %643 = vmatpush1.bf16.msra.mxu0 0
  %644 = vmatprep.subr.bf16.mxu0 0
  %645 = vmatpush1.bf16.msra.mxu0 0
  %646 = vmatprep.subr.bf16.mxu0 0
  %647 = vmatpush1.bf16.msra.mxu0 0
  %648 = vmatprep.subr.bf16.mxu0 0
  %649 = vmatpush1.bf16.msra.mxu0 0
  %650 = vmatprep.mubr.bf16.mxu0 0
  %651 = vmatmul.mubr.bf16.gmra.mrb[0].mxu0 %v477
  %v652 = vpop.f32.mrb[0].mxu0
  %v653 = vadd.f32 %v588, %v652
  %v654 = vpop.f32.mrb[0].mxu0
  %v655 = vpop.f32.mrb[0].mxu0
  %v656 = vadd.f32 %v591, %v655
  %v657 = vpop.f32.mrb[0].mxu0
  %658 = vmatprep.mubr.bf16.mxu0 0
  %659 = vmatmul.mubr.bf16.gmra.mrb[0].mxu0 %v480
  %v660 = vpop.f32.mrb[0].mxu0
  %v661 = vadd.f32 %v596, %v660
  %v662 = vpop.f32.mrb[0].mxu0
  %v663 = vpop.f32.mrb[0].mxu0
  %v664 = vadd.f32 %v599, %v663
  %v665 = vpop.f32.mrb[0].mxu0
  %666 = vmatprep.mubr.bf16.mxu0 0
  %667 = vmatmul.mubr.bf16.gmra.mrb[0].mxu0 %v483
  %v668 = vpop.f32.mrb[0].mxu0
  %v669 = vadd.f32 %v604, %v668
  %v670 = vpop.f32.mrb[0].mxu0
  %v671 = vpop.f32.mrb[0].mxu0
  %v672 = vadd.f32 %v607, %v671
  %v673 = vpop.f32.mrb[0].mxu0
  %674 = vmatprep.mubr.bf16.mxu0 0
  %675 = vmatmul.mubr.bf16.gmra.mrb[0].mxu0 %v486
  %v676 = vpop.f32.mrb[0].mxu0
  %v677 = vadd.f32 %v612, %v676
  %v678 = vpop.f32.mrb[0].mxu0
  %v679 = vpop.f32.mrb[0].mxu0
  %v680 = vadd.f32 %v615, %v679
  %v681 = vpop.f32.mrb[0].mxu0
  %682 = vdwg.mxu0
  %v683 = vmax.f32 %v653, 0.0
  %v684 = vmax.f32 %v656, 0.0
  %v685 = vmax.f32 %v661, 0.0
  %v686 = vmax.f32 %v664, 0.0
  %v687 = vmax.f32 %v669, 0.0
  %v688 = vmax.f32 %v672, 0.0
  %v689 = vmax.f32 %v677, 0.0
  %v690 = vmax.f32 %v680, 0.0
  %v691 = vpack.c.bf16 %v684, %v683
  %v692 = vpack.c.bf16 %v686, %v685
  %v693 = vpack.c.bf16 %v688, %v687
  %v694 = vpack.c.bf16 %v690, %v689
  %v699 = vunpack.c.l.b16 %v691
  %v700 = vunpack.c.h.b16 %v691
  %v701 = vunpack.c.l.b16 %v692
  %v702 = vunpack.c.h.b16 %v692
  %v703 = vunpack.c.l.b16 %v693
  %v704 = vunpack.c.h.b16 %v693
  %v705 = vunpack.c.l.b16 %v694
  %v706 = vunpack.c.h.b16 %v694
  %v707 = vpack.c.b16 %v699, %v699
  %v708 = vpack.c.b16 %v700, %v700
  %v709 = vpack.c.b16 %v701, %v701
  %v710 = vpack.c.b16 %v702, %v702
  %v711 = vpack.c.b16 %v703, %v703
  %v712 = vpack.c.b16 %v704, %v704
  %v713 = vpack.c.b16 %v705, %v705
  %v714 = vpack.c.b16 %v706, %v706
  %723 = vst [vmem:[%s3] sm:$0xf] %v707
  %724 = vst [vmem:[%s3 + $0x4] sm:$0xf] %v708
  %725 = vst [vmem:[%s3 + $0x8] sm:$0xf] %v709
  %726 = vst [vmem:[%s3 + $0xc] sm:$0xf] %v710
  %727 = vst [vmem:[%s3 + $0x10] sm:$0xf] %v711
  %728 = vst [vmem:[%s3 + $0x14] sm:$0xf] %v712
  %729 = vst [vmem:[%s3 + $0x18] sm:$0xf] %v713
  %730 = vst [vmem:[%s3 + $0x1c] sm:$0xf] %v714
  // Predicated region
  $region14: #{dqn_forward.6} parent=0 // pred_check
    _
  $region15: #{dqn_forward.6} parent=0 // pred_check_branch
    %732 = sbr.rel (0) target = $region17
  $region16: #{dqn_forward.6} parent=0 // pred_region
    _
  $region17: #{dqn_forward.6} parent=0 // pred_fallthru
    _
  // Predicated region
  $region18: #{dqn_forward.6} parent=0 // pred_check
    _
  $region19: #{dqn_forward.6} parent=0 // pred_check_branch
    %734 = sbr.rel (0) target = $region21
  $region20: #{dqn_forward.6} parent=0 // pred_region
    _
  $region21: #{dqn_forward.6} parent=0 // pred_fallthru
    _

// kernel: dqn_forward.7
$region0: #{dqn_forward.7}
  #allocation0 [shape = 'u32[]', space=smem, size = 0x4, offset = 0x4, fixed_abs, tag = 'smem constant byte address 0x4 - core index']
  #allocation1 [shape = 'u32[144,128]{1,0:T(1,128)}', space=vmem, size = 0x12000, scoped, tag = 'internal scratch']
  %s0 = inlined_call_operand.vmem [shape: bf16[2,64], index: 0, kind: input, shape index: {}]
  %s1 = inlined_call_operand.vmem [shape: bf16[64,512], index: 1, kind: input, shape index: {}]
  %s2 = inlined_call_operand.vmem [shape: f32[1,512], index: 2, kind: input, shape index: {}]
  %s3 = inlined_call_operand.vmem [shape: bf16[512,6], index: 3, kind: input, shape index: {}]
  %s4 = inlined_call_operand.vmem [shape: f32[1,6], index: 4, kind: input, shape index: {}]
  %s5 = inlined_call_operand.hbm [shape: f32[2,6], index: 5, kind: output, shape index: {}]
  %s6 = sld [smem:[#allocation0]]
  $region30: #{dqn_forward.7} parent=0
    _
  %s8 = ssub.s32 1, %s6
  %s9 = scalar_select 0, %s8, %s6
  $region1: #{dqn_forward.7} parent=0
    #allocation2 [shape = 'u8[1024]{0}', space=vmem, size = 0x400, scoped, tag = 'output window, operand 0, single buffered']
    #allocation3 [shape = 's32[1]{0}', space=sflag, size = 0x4, scoped, tag = 'scoped memory for dqn_forward.7']
    %10 = vsyncpa [#allocation3], 0
    // Predicated region
    $region2: #{dqn_forward.7} parent=1 // pred_check
      _
    $region3: #{dqn_forward.7} parent=1 // pred_check_branch
      %12 = sbr.rel (0) target = $region5
    $region4: #{dqn_forward.7} parent=1 // pred_region
      _
    $region5: #{dqn_forward.7} parent=1 // pred_fallthru
      _
    // Predicated region
    $region6: #{dqn_forward.7} parent=1 // pred_check
      _
    $region7: #{dqn_forward.7} parent=1 // pred_check_branch
      %14 = sbr.rel (0) target = $region9
    $region8: #{dqn_forward.7} parent=1 // pred_region
      _
    $region9: #{dqn_forward.7} parent=1 // pred_fallthru
      _
    // Predicated region
    $region10: #{dqn_forward.7} parent=1 // pred_check
      _
    $region11: #{dqn_forward.7} parent=1 // pred_check_branch
      %16 = sbr.rel (0) target = $region13
    $region12: #{dqn_forward.7} parent=1 // pred_region
      _
    $region13: #{dqn_forward.7} parent=1 // pred_fallthru
      _
    // Predicated region
    $region14: #{dqn_forward.7} parent=1 // pred_check
      _
    $region15: #{dqn_forward.7} parent=1 // pred_check_branch
      %18 = sbr.rel (0) target = $region17
    $region16: #{dqn_forward.7} parent=1 // pred_region
      _
    $region17: #{dqn_forward.7} parent=1 // pred_fallthru
      _
    // Predicated region
    $region18: #{dqn_forward.7} parent=1 // pred_check
      _
    $region19: #{dqn_forward.7} parent=1 // pred_check_branch
      %20 = sbr.rel (0) target = $region21
    $region20: #{dqn_forward.7} parent=1 // pred_region
      _
    $region21: #{dqn_forward.7} parent=1 // pred_fallthru
      _
    %v22 = vld [vmem:[%s0] sm:$0x1]
    %v23 = vld [vmem:[%s1] sm:$0xff]
    %v24 = vld [vmem:[%s1 + $0x8] sm:$0xff]
    %v25 = vld [vmem:[%s1 + $0x10] sm:$0xff]
    %v26 = vld [vmem:[%s1 + $0x18] sm:$0xff]
    %v27 = vld [vmem:[%s1 + $0x20] sm:$0xff]
    %v28 = vld [vmem:[%s1 + $0x28] sm:$0xff]
    %v29 = vld [vmem:[%s1 + $0x30] sm:$0xff]
    %v30 = vld [vmem:[%s1 + $0x38] sm:$0xff]
    %v31 = vld [vmem:[%s1 + $0x40] sm:$0xff]
    %v32 = vld [vmem:[%s1 + $0x48] sm:$0xff]
    %v33 = vld [vmem:[%s1 + $0x50] sm:$0xff]
    %v34 = vld [vmem:[%s1 + $0x58] sm:$0xff]
    %v35 = vld [vmem:[%s1 + $0x60] sm:$0xff]
    %v36 = vld [vmem:[%s1 + $0x68] sm:$0xff]
    %v37 = vld [vmem:[%s1 + $0x70] sm:$0xff]
    %v38 = vld [vmem:[%s1 + $0x78] sm:$0xff]
    %v39 = vld [vmem:[%s2] sm:$0xf]
    %v41 = vlaneseq
    %v42 = vshrl.u32 %v41, 7
    %v43 = vsub.s32 0, %v42
    %v44 = vrot.slane %v39, %v43
    %v45 = vlaneseq
    %v46 = vshrl.u32 %v45, 7
    %v47 = vsub.s32 1, %v46
    %v48 = vrot.slane %v39, %v47
    %v49 = vlaneseq
    %v50 = vshrl.u32 %v49, 7
    %v51 = vsub.s32 2, %v50
    %v52 = vrot.slane %v39, %v51
    %v53 = vlaneseq
    %v54 = vshrl.u32 %v53, 7
    %v55 = vsub.s32 3, %v54
    %v56 = vrot.slane %v39, %v55
    %v77 = vunpack.c.l.b16 %v23
    %v78 = vunpack.c.h.b16 %v23
    %v79 = vunpack.c.l.b16 %v24
    %v80 = vunpack.c.h.b16 %v24
    %v81 = vunpack.c.l.b16 %v25
    %v82 = vunpack.c.h.b16 %v25
    %v83 = vunpack.c.l.b16 %v26
    %v84 = vunpack.c.h.b16 %v26
    %v85 = vunpack.c.l.b16 %v27
    %v86 = vunpack.c.h.b16 %v27
    %v87 = vunpack.c.l.b16 %v28
    %v88 = vunpack.c.h.b16 %v28
    %v89 = vunpack.c.l.b16 %v29
    %v90 = vunpack.c.h.b16 %v29
    %v91 = vunpack.c.l.b16 %v30
    %v92 = vunpack.c.h.b16 %v30
    %v93 = vunpack.c.l.b16 %v31
    %v94 = vunpack.c.h.b16 %v31
    %v95 = vunpack.c.l.b16 %v32
    %v96 = vunpack.c.h.b16 %v32
    %v97 = vunpack.c.l.b16 %v33
    %v98 = vunpack.c.h.b16 %v33
    %v99 = vunpack.c.l.b16 %v34
    %v100 = vunpack.c.h.b16 %v34
    %v101 = vunpack.c.l.b16 %v35
    %v102 = vunpack.c.h.b16 %v35
    %v103 = vunpack.c.l.b16 %v36
    %v104 = vunpack.c.h.b16 %v36
    %v105 = vunpack.c.l.b16 %v37
    %v106 = vunpack.c.h.b16 %v37
    %v107 = vunpack.c.l.b16 %v38
    %v108 = vunpack.c.h.b16 %v38
    %v109 = vpack.c.b16 %v81, %v77
    %v110 = vpack.c.b16 %v82, %v78
    %v111 = vpack.c.b16 %v83, %v79
    %v112 = vpack.c.b16 %v84, %v80
    %v113 = vpack.c.b16 %v89, %v85
    %v114 = vpack.c.b16 %v90, %v86
    %v115 = vpack.c.b16 %v91, %v87
    %v116 = vpack.c.b16 %v92, %v88
    %v117 = vpack.c.b16 %v97, %v93
    %v118 = vpack.c.b16 %v98, %v94
    %v119 = vpack.c.b16 %v99, %v95
    %v120 = vpack.c.b16 %v100, %v96
    %v121 = vpack.c.b16 %v105, %v101
    %v122 = vpack.c.b16 %v106, %v102
    %v123 = vpack.c.b16 %v107, %v103
    %v124 = vpack.c.b16 %v108, %v104
    %vm141 = vcmask 523264
    %v143 = vsel %vm141, %v22, 0
    %145 = vmatprep.subr.bf16.mxu0 %v110
    %146 = vmatpush1.bf16.msra.mxu0 %v109
    %147 = vmatprep.subr.bf16.mxu0 %v114
    %148 = vmatpush1.bf16.msra.mxu0 %v113
    %149 = vmatprep.subr.bf16.mxu0 %v118
    %150 = vmatpush1.bf16.msra.mxu0 %v117
    %151 = vmatprep.subr.bf16.mxu0 %v122
    %152 = vmatpush1.bf16.msra.mxu0 %v121
    %153 = vmatprep.subr.bf16.mxu0 0
    %154 = vmatpush1.bf16.msra.mxu0 0
    %155 = vmatprep.subr.bf16.mxu0 0
    %156 = vmatpush1.bf16.msra.mxu0 0
    %157 = vmatprep.subr.bf16.mxu0 0
    %158 = vmatpush1.bf16.msra.mxu0 0
    %159 = vmatprep.subr.bf16.mxu0 0
    %160 = vmatpush1.bf16.msra.mxu0 0
    %161 = vmatprep.subr.bf16.mxu0 0
    %162 = vmatpush1.bf16.msra.mxu0 0
    %163 = vmatprep.subr.bf16.mxu0 0
    %164 = vmatpush1.bf16.msra.mxu0 0
    %165 = vmatprep.subr.bf16.mxu0 0
    %166 = vmatpush1.bf16.msra.mxu0 0
    %167 = vmatprep.subr.bf16.mxu0 0
    %168 = vmatpush1.bf16.msra.mxu0 0
    %169 = vmatprep.subr.bf16.mxu0 0
    %170 = vmatpush1.bf16.msra.mxu0 0
    %171 = vmatprep.subr.bf16.mxu0 0
    %172 = vmatpush1.bf16.msra.mxu0 0
    %173 = vmatprep.subr.bf16.mxu0 0
    %174 = vmatpush1.bf16.msra.mxu0 0
    %175 = vmatprep.subr.bf16.mxu0 0
    %176 = vmatpush1.bf16.msra.mxu0 0
    %177 = vmatprep.mubr.bf16.mxu0 0
    %178 = vmatmul.mubr.bf16.gmra.mrb[0].mxu0 %v143
    %v179 = vpop.f32.mrb[0].mxu0
    %v180 = vadd.f32 %v44, %v179
    %v181 = vpop.f32.mrb[0].mxu0
    %v182 = vadd.f32 %v48, %v181
    %v183 = vpop.f32.mrb[0].mxu0
    %v184 = vpop.f32.mrb[0].mxu0
    %185 = vdwg.mxu0
    %186 = vmatprep.subr.bf16.mxu0 %v112
    %187 = vmatpush1.bf16.msra.mxu0 %v111
    %188 = vmatprep.subr.bf16.mxu0 %v116
    %189 = vmatpush1.bf16.msra.mxu0 %v115
    %190 = vmatprep.subr.bf16.mxu0 %v120
    %191 = vmatpush1.bf16.msra.mxu0 %v119
    %192 = vmatprep.subr.bf16.mxu0 %v124
    %193 = vmatpush1.bf16.msra.mxu0 %v123
    %194 = vmatprep.subr.bf16.mxu0 0
    %195 = vmatpush1.bf16.msra.mxu0 0
    %196 = vmatprep.subr.bf16.mxu0 0
    %197 = vmatpush1.bf16.msra.mxu0 0
    %198 = vmatprep.subr.bf16.mxu0 0
    %199 = vmatpush1.bf16.msra.mxu0 0
    %200 = vmatprep.subr.bf16.mxu0 0
    %201 = vmatpush1.bf16.msra.mxu0 0
    %202 = vmatprep.subr.bf16.mxu0 0
    %203 = vmatpush1.bf16.msra.mxu0 0
    %204 = vmatprep.subr.bf16.mxu0 0
    %205 = vmatpush1.bf16.msra.mxu0 0
    %206 = vmatprep.subr.bf16.mxu0 0
    %207 = vmatpush1.bf16.msra.mxu0 0
    %208 = vmatprep.subr.bf16.mxu0 0
    %209 = vmatpush1.bf16.msra.mxu0 0
    %210 = vmatprep.subr.bf16.mxu0 0
    %211 = vmatpush1.bf16.msra.mxu0 0
    %212 = vmatprep.subr.bf16.mxu0 0
    %213 = vmatpush1.bf16.msra.mxu0 0
    %214 = vmatprep.subr.bf16.mxu0 0
    %215 = vmatpush1.bf16.msra.mxu0 0
    %216 = vmatprep.subr.bf16.mxu0 0
    %217 = vmatpush1.bf16.msra.mxu0 0
    %218 = vmatprep.mubr.bf16.mxu0 0
    %219 = vmatmul.mubr.bf16.gmra.mrb[0].mxu0 %v143
    %v220 = vpop.f32.mrb[0].mxu0
    %v221 = vadd.f32 %v52, %v220
    %v222 = vpop.f32.mrb[0].mxu0
    %v223 = vadd.f32 %v56, %v222
    %v224 = vpop.f32.mrb[0].mxu0
    %v225 = vpop.f32.mrb[0].mxu0
    %226 = vdwg.mxu0
    %v227 = vmax.f32 %v180, 0.0
    %v228 = vmax.f32 %v182, 0.0
    %v229 = vmax.f32 %v221, 0.0
    %v230 = vmax.f32 %v223, 0.0
    %v231 = vpack.c.bf16 %v227, %v227
    %v232 = vpack.c.bf16 %v228, %v228
    %v233 = vpack.c.bf16 %v229, %v229
    %v234 = vpack.c.bf16 %v230, %v230
    %v235 = vld [vmem:[%s3] sm:$0xf]
    %v236 = vld [vmem:[%s3 + $0x4] sm:$0xf]
    %v237 = vld [vmem:[%s3 + $0x8] sm:$0xf]
    %v238 = vld [vmem:[%s3 + $0xc] sm:$0xf]
    %v239 = vld [vmem:[%s3 + $0x10] sm:$0xf]
    %v240 = vld [vmem:[%s3 + $0x14] sm:$0xf]
    %v241 = vld [vmem:[%s3 + $0x18] sm:$0xf]
    %v242 = vld [vmem:[%s3 + $0x1c] sm:$0xf]
    %v243 = vld [vmem:[%s3 + $0x20] sm:$0xf]
    %v244 = vld [vmem:[%s3 + $0x24] sm:$0xf]
    %v245 = vld [vmem:[%s3 + $0x28] sm:$0xf]
    %v246 = vld [vmem:[%s3 + $0x2c] sm:$0xf]
    %v247 = vld [vmem:[%s3 + $0x30] sm:$0xf]
    %v248 = vld [vmem:[%s3 + $0x34] sm:$0xf]
    %v249 = vld [vmem:[%s3 + $0x38] sm:$0xf]
    %v250 = vld [vmem:[%s3 + $0x3c] sm:$0xf]
    %v251 = vld [vmem:[%s3 + $0x40] sm:$0xf]
    %v252 = vld [vmem:[%s3 + $0x44] sm:$0xf]
    %v253 = vld [vmem:[%s3 + $0x48] sm:$0xf]
    %v254 = vld [vmem:[%s3 + $0x4c] sm:$0xf]
    %v255 = vld [vmem:[%s3 + $0x50] sm:$0xf]
    %v256 = vld [vmem:[%s3 + $0x54] sm:$0xf]
    %v257 = vld [vmem:[%s3 + $0x58] sm:$0xf]
    %v258 = vld [vmem:[%s3 + $0x5c] sm:$0xf]
    %v259 = vld [vmem:[%s3 + $0x60] sm:$0xf]
    %v260 = vld [vmem:[%s3 + $0x64] sm:$0xf]
    %v261 = vld [vmem:[%s3 + $0x68] sm:$0xf]
    %v262 = vld [vmem:[%s3 + $0x6c] sm:$0xf]
    %v263 = vld [vmem:[%s3 + $0x70] sm:$0xf]
    %v264 = vld [vmem:[%s3 + $0x74] sm:$0xf]
    %v265 = vld [vmem:[%s3 + $0x78] sm:$0xf]
    %v266 = vld [vmem:[%s3 + $0x7c] sm:$0xf]
    %v267 = vld [vmem:[%s3 + $0x80] sm:$0xf]
    %v268 = vld [vmem:[%s3 + $0x84] sm:$0xf]
    %v269 = vld [vmem:[%s3 + $0x88] sm:$0xf]
    %v270 = vld [vmem:[%s3 + $0x8c] sm:$0xf]
    %v271 = vld [vmem:[%s3 + $0x90] sm:$0xf]
    %v272 = vld [vmem:[%s3 + $0x94] sm:$0xf]
    %v273 = vld [vmem:[%s3 + $0x98] sm:$0xf]
    %v274 = vld [vmem:[%s3 + $0x9c] sm:$0xf]
    %v275 = vld [vmem:[%s3 + $0xa0] sm:$0xf]
    %v276 = vld [vmem:[%s3 + $0xa4] sm:$0xf]
    %v277 = vld [vmem:[%s3 + $0xa8] sm:$0xf]
    %v278 = vld [vmem:[%s3 + $0xac] sm:$0xf]
    %v279 = vld [vmem:[%s3 + $0xb0] sm:$0xf]
    %v280 = vld [vmem:[%s3 + $0xb4] sm:$0xf]
    %v281 = vld [vmem:[%s3 + $0xb8] sm:$0xf]
    %v282 = vld [vmem:[%s3 + $0xbc] sm:$0xf]
    %v283 = vld [vmem:[%s3 + $0xc0] sm:$0xf]
    %v284 = vld [vmem:[%s3 + $0xc4] sm:$0xf]
    %v285 = vld [vmem:[%s3 + $0xc8] sm:$0xf]
    %v286 = vld [vmem:[%s3 + $0xcc] sm:$0xf]
    %v287 = vld [vmem:[%s3 + $0xd0] sm:$0xf]
    %v288 = vld [vmem:[%s3 + $0xd4] sm:$0xf]
    %v289 = vld [vmem:[%s3 + $0xd8] sm:$0xf]
    %v290 = vld [vmem:[%s3 + $0xdc] sm:$0xf]
    %v291 = vld [vmem:[%s3 + $0xe0] sm:$0xf]
    %v292 = vld [vmem:[%s3 + $0xe4] sm:$0xf]
    %v293 = vld [vmem:[%s3 + $0xe8] sm:$0xf]
    %v294 = vld [vmem:[%s3 + $0xec] sm:$0xf]
    %v295 = vld [vmem:[%s3 + $0xf0] sm:$0xf]
    %v296 = vld [vmem:[%s3 + $0xf4] sm:$0xf]
    %v297 = vld [vmem:[%s3 + $0xf8] sm:$0xf]
    %v298 = vld [vmem:[%s3 + $0xfc] sm:$0xf]
    %v299 = vld [vmem:[%s4] sm:$0x1]
    %v301 = vlaneseq
    %v302 = vshrl.u32 %v301, 7
    %v303 = vsub.s32 0, %v302
    %v304 = vrot.slane %v299, %v303
    %v370 = vunpack.c.l.b16 %v235
    %v371 = vunpack.c.l.b16 %v236
    %v372 = vunpack.c.l.b16 %v237
    %v373 = vunpack.c.l.b16 %v238
    %v374 = vunpack.c.l.b16 %v239
    %v375 = vunpack.c.l.b16 %v240
    %v376 = vunpack.c.l.b16 %v241
    %v377 = vunpack.c.l.b16 %v242
    %v378 = vunpack.c.l.b16 %v243
    %v379 = vunpack.c.l.b16 %v244
    %v380 = vunpack.c.l.b16 %v245
    %v381 = vunpack.c.l.b16 %v246
    %v382 = vunpack.c.l.b16 %v247
    %v383 = vunpack.c.l.b16 %v248
    %v384 = vunpack.c.l.b16 %v249
    %v385 = vunpack.c.l.b16 %v250
    %v386 = vunpack.c.l.b16 %v251
    %v387 = vunpack.c.l.b16 %v252
    %v388 = vunpack.c.l.b16 %v253
    %v389 = vunpack.c.l.b16 %v254
    %v390 = vunpack.c.l.b16 %v255
    %v391 = vunpack.c.l.b16 %v256
    %v392 = vunpack.c.l.b16 %v257
    %v393 = vunpack.c.l.b16 %v258
    %v394 = vunpack.c.l.b16 %v259
    %v395 = vunpack.c.l.b16 %v260
    %v396 = vunpack.c.l.b16 %v261
    %v397 = vunpack.c.l.b16 %v262
    %v398 = vunpack.c.l.b16 %v263
    %v399 = vunpack.c.l.b16 %v264
    %v400 = vunpack.c.l.b16 %v265
    %v401 = vunpack.c.l.b16 %v266
    %v402 = vunpack.c.l.b16 %v267
    %v403 = vunpack.c.l.b16 %v268
    %v404 = vunpack.c.l.b16 %v269
    %v405 = vunpack.c.l.b16 %v270
    %v406 = vunpack.c.l.b16 %v271
    %v407 = vunpack.c.l.b16 %v272
    %v408 = vunpack.c.l.b16 %v273
    %v409 = vunpack.c.l.b16 %v274
    %v410 = vunpack.c.l.b16 %v275
    %v411 = vunpack.c.l.b16 %v276
    %v412 = vunpack.c.l.b16 %v277
    %v413 = vunpack.c.l.b16 %v278
    %v414 = vunpack.c.l.b16 %v279
    %v415 = vunpack.c.l.b16 %v280
    %v416 = vunpack.c.l.b16 %v281
    %v417 = vunpack.c.l.b16 %v282
    %v418 = vunpack.c.l.b16 %v283
    %v419 = vunpack.c.l.b16 %v284
    %v420 = vunpack.c.l.b16 %v285
    %v421 = vunpack.c.l.b16 %v286
    %v422 = vunpack.c.l.b16 %v287
    %v423 = vunpack.c.l.b16 %v288
    %v424 = vunpack.c.l.b16 %v289
    %v425 = vunpack.c.l.b16 %v290
    %v426 = vunpack.c.l.b16 %v291
    %v427 = vunpack.c.l.b16 %v292
    %v428 = vunpack.c.l.b16 %v293
    %v429 = vunpack.c.l.b16 %v294
    %v430 = vunpack.c.l.b16 %v295
    %v431 = vunpack.c.l.b16 %v296
    %v432 = vunpack.c.l.b16 %v297
    %v433 = vunpack.c.l.b16 %v298
    %v434 = vpack.c.b16 %v371, %v370
    %v435 = vpack.c.b16 %v373, %v372
    %v436 = vpack.c.b16 %v375, %v374
    %v437 = vpack.c.b16 %v377, %v376
    %v438 = vpack.c.b16 %v379, %v378
    %v439 = vpack.c.b16 %v381, %v380
    %v440 = vpack.c.b16 %v383, %v382
    %v441 = vpack.c.b16 %v385, %v384
    %v442 = vpack.c.b16 %v387, %v386
    %v443 = vpack.c.b16 %v389, %v388
    %v444 = vpack.c.b16 %v391, %v390
    %v445 = vpack.c.b16 %v393, %v392
    %v446 = vpack.c.b16 %v395, %v394
    %v447 = vpack.c.b16 %v397, %v396
    %v448 = vpack.c.b16 %v399, %v398
    %v449 = vpack.c.b16 %v401, %v400
    %v450 = vpack.c.b16 %v403, %v402
    %v451 = vpack.c.b16 %v405, %v404
    %v452 = vpack.c.b16 %v407, %v406
    %v453 = vpack.c.b16 %v409, %v408
    %v454 = vpack.c.b16 %v411, %v410
    %v455 = vpack.c.b16 %v413, %v412
    %v456 = vpack.c.b16 %v415, %v414
    %v457 = vpack.c.b16 %v417, %v416
    %v458 = vpack.c.b16 %v419, %v418
    %v459 = vpack.c.b16 %v421, %v420
    %v460 = vpack.c.b16 %v423, %v422
    %v461 = vpack.c.b16 %v425, %v424
    %v462 = vpack.c.b16 %v427, %v426
    %v463 = vpack.c.b16 %v429, %v428
    %v464 = vpack.c.b16 %v431, %v430
    %v465 = vpack.c.b16 %v433, %v432
    %498 = vmatprep.subr.bf16.mxu0 0
    %499 = vmatpush1.bf16.msra.mxu0 %v434
    %500 = vmatprep.subr.bf16.mxu0 0
    %501 = vmatpush1.bf16.msra.mxu0 %v435
    %502 = vmatprep.subr.bf16.mxu0 0
    %503 = vmatpush1.bf16.msra.mxu0 %v436
    %504 = vmatprep.subr.bf16.mxu0 0
    %505 = vmatpush1.bf16.msra.mxu0 %v437
    %506 = vmatprep.subr.bf16.mxu0 0
    %507 = vmatpush1.bf16.msra.mxu0 %v438
    %508 = vmatprep.subr.bf16.mxu0 0
    %509 = vmatpush1.bf16.msra.mxu0 %v439
    %510 = vmatprep.subr.bf16.mxu0 0
    %511 = vmatpush1.bf16.msra.mxu0 %v440
    %512 = vmatprep.subr.bf16.mxu0 0
    %513 = vmatpush1.bf16.msra.mxu0 %v441
    %514 = vmatprep.subr.bf16.mxu0 0
    %515 = vmatpush1.bf16.msra.mxu0 %v442
    %516 = vmatprep.subr.bf16.mxu0 0
    %517 = vmatpush1.bf16.msra.mxu0 %v443
    %518 = vmatprep.subr.bf16.mxu0 0
    %519 = vmatpush1.bf16.msra.mxu0 %v444
    %520 = vmatprep.subr.bf16.mxu0 0
    %521 = vmatpush1.bf16.msra.mxu0 %v445
    %522 = vmatprep.subr.bf16.mxu0 0
    %523 = vmatpush1.bf16.msra.mxu0 %v446
    %524 = vmatprep.subr.bf16.mxu0 0
    %525 = vmatpush1.bf16.msra.mxu0 %v447
    %526 = vmatprep.subr.bf16.mxu0 0
    %527 = vmatpush1.bf16.msra.mxu0 %v448
    %528 = vmatprep.subr.bf16.mxu0 0
    %529 = vmatpush1.bf16.msra.mxu0 %v449
    %530 = vmatprep.mubr.bf16.mxu0 %v232
    %531 = vmatmul.mubr.bf16.gmra.mrb[0].mxu0 %v231
    %v532 = vpop.f32.mrb[0].mxu0
    %v533 = vadd.f32 %v304, %v532
    %v534 = vpop.f32.mrb[0].mxu0
    %v535 = vpop.f32.mrb[0].mxu0
    %v536 = vpop.f32.mrb[0].mxu0
    %537 = vdwg.mxu0
    %538 = vmatprep.subr.bf16.mxu0 0
    %539 = vmatpush1.bf16.msra.mxu0 %v450
    %540 = vmatprep.subr.bf16.mxu0 0
    %541 = vmatpush1.bf16.msra.mxu0 %v451
    %542 = vmatprep.subr.bf16.mxu0 0
    %543 = vmatpush1.bf16.msra.mxu0 %v452
    %544 = vmatprep.subr.bf16.mxu0 0
    %545 = vmatpush1.bf16.msra.mxu0 %v453
    %546 = vmatprep.subr.bf16.mxu0 0
    %547 = vmatpush1.bf16.msra.mxu0 %v454
    %548 = vmatprep.subr.bf16.mxu0 0
    %549 = vmatpush1.bf16.msra.mxu0 %v455
    %550 = vmatprep.subr.bf16.mxu0 0
    %551 = vmatpush1.bf16.msra.mxu0 %v456
    %552 = vmatprep.subr.bf16.mxu0 0
    %553 = vmatpush1.bf16.msra.mxu0 %v457
    %554 = vmatprep.subr.bf16.mxu0 0
    %555 = vmatpush1.bf16.msra.mxu0 %v458
    %556 = vmatprep.subr.bf16.mxu0 0
    %557 = vmatpush1.bf16.msra.mxu0 %v459
    %558 = vmatprep.subr.bf16.mxu0 0
    %559 = vmatpush1.bf16.msra.mxu0 %v460
    %560 = vmatprep.subr.bf16.mxu0 0
    %561 = vmatpush1.bf16.msra.mxu0 %v461
    %562 = vmatprep.subr.bf16.mxu0 0
    %563 = vmatpush1.bf16.msra.mxu0 %v462
    %564 = vmatprep.subr.bf16.mxu0 0
    %565 = vmatpush1.bf16.msra.mxu0 %v463
    %566 = vmatprep.subr.bf16.mxu0 0
    %567 = vmatpush1.bf16.msra.mxu0 %v464
    %568 = vmatprep.subr.bf16.mxu0 0
    %569 = vmatpush1.bf16.msra.mxu0 %v465
    %570 = vmatprep.mubr.bf16.mxu0 %v234
    %571 = vmatmul.mubr.bf16.gmra.mrb[0].mxu0 %v233
    %v572 = vpop.f32.mrb[0].mxu0
    %v573 = vadd.f32 %v533, %v572
    %v574 = vpop.f32.mrb[0].mxu0
    %v575 = vpop.f32.mrb[0].mxu0
    %v576 = vpop.f32.mrb[0].mxu0
    %577 = vdwg.mxu0
    %vm578 = vcmask 41984
    %579 = vst.msk [vmem:[#allocation2] sm:$0x3] %vm578, %v573
    // Predicated region
    $region22: #{dqn_forward.7} parent=1 // pred_check
      _
    $region23: #{dqn_forward.7} parent=1 // pred_check_branch
      %581 = sbr.rel (0) target = $region25
    $region24: #{dqn_forward.7} parent=1 // pred_region
      %s583 = ssub.s32 32, 32
      %584 = vsyncadd [#allocation3], %s583
      %s586 = sshll.u32 [#allocation2], 4
      %s587 = int_to_ptr.vmem [resolvable:$true] %s586
      %589 = dma.vmem_to_hbm [thread:$0]  %s587, 32, %s5, [#allocation3]
    $region25: #{dqn_forward.7} parent=1 // pred_fallthru
      _
    // Predicated region
    $region26: #{dqn_forward.7} parent=1 // pred_check
      _
    $region27: #{dqn_forward.7} parent=1 // pred_check_branch
      %591 = sbr.rel (0) target = $region29
    $region28: #{dqn_forward.7} parent=1 // pred_region
      %592 = dma.done [#allocation3], 32
    $region29: #{dqn_forward.7} parent=1 // pred_fallthru
      _
    %593 = vsyncpa [#allocation3], 1

</llo_original>
